<compile_context>
chip_gen: v5e
topology: v5e:2x2
jax: 0.10.0
libtpu: 0.0.40
codegen_flags: <defaults>
</compile_context>

<pallas_src>
import functools

import jax
import jax.numpy as jnp
from jax import lax
from jax.experimental import pallas as pl
from jax.experimental.pallas import tpu as pltpu


# ------------------------------ Fused kernel ------------------------------- #

def _cross_attention_kernel(q_ref, x_ref, wq_ref, wk_ref, wv_ref, wp_ref,
                            bq_ref, bk_ref, bv_ref, bp_ref, o_ref,
                            *, num_heads, head_dim, scale):
    """One (batch, query-tile) grid step: fused proj -> SDPA -> proj."""
    q_in = q_ref[0]                        # (tq, C)
    x_in = x_ref[0]                        # (N,  C)
    compute_dtype = x_in.dtype
    tq, C = q_in.shape

    acc = jnp.zeros((tq, C), jnp.float32)      # f32 accumulator for out-proj
    for h in range(num_heads):                 # unrolled; heads are independent
        lo = h * head_dim
        hi = lo + head_dim

        # Per-head projections: each head uses disjoint weight columns, so
        # nothing is recomputed across heads.
        q_h = jnp.dot(q_in, wq_ref[:, lo:hi],
                      preferred_element_type=jnp.float32)
        q_h = (q_h + bq_ref[:, lo:hi]) * scale            # fold scale into q
        k_h = jnp.dot(x_in, wk_ref[:, lo:hi],
                      preferred_element_type=jnp.float32)
        k_h = k_h + bk_ref[:, lo:hi]
        v_h = jnp.dot(x_in, wv_ref[:, lo:hi],
                      preferred_element_type=jnp.float32)
        v_h = (v_h + bv_ref[:, lo:hi]).astype(compute_dtype)

        # Scores: contract the last axis of both operands (no explicit k.T).
        s = lax.dot_general(q_h, k_h, (((1,), (1,)), ((), ())),
                            preferred_element_type=jnp.float32)   # (tq, N)

        # Softmax in f32; approximate reciprocal runs on the otherwise-idle EUP.
        m = jnp.max(s, axis=-1, keepdims=True)
        p = jnp.exp(s - m)
        denom = jnp.sum(p, axis=-1, keepdims=True)
        probs = p * pl.reciprocal(denom, approx=True)

        # P @ V stays in the model dtype; accumulate in f32.
        attn = jnp.dot(probs.astype(compute_dtype), v_h,
                       preferred_element_type=jnp.float32)        # (tq, d)

        # Output projection decomposes over heads:
        #   out = sum_h attn_h @ Wproj[h*d:(h+1)*d, :]
        acc = acc + jnp.dot(attn.astype(wp_ref.dtype), wp_ref[lo:hi, :],
                            preferred_element_type=jnp.float32)   # (tq, C)

    o_ref[0] = (acc + bp_ref[...]).astype(o_ref.dtype)


# ------------------------------ Module wrapper ------------------------------ #

def init_cross_attention_params(key, dim, qkv_bias=False, proj_bias=True,
                                dtype=jnp.float32):
    k1, k2, k3, k4 = jax.random.split(key, 4)
    s = 1.0 / jnp.sqrt(dim)
    params = {
        "wq":    jax.random.uniform(k1, (dim, dim), dtype, -s, s),
        "wkv":   jax.random.uniform(k2, (dim, 2 * dim), dtype, -s, s),
        "wproj": jax.random.uniform(k3, (dim, dim), dtype, -s, s),
        "bq": None,
        "bkv": None,
        "bproj": jax.random.uniform(k4, (dim,), dtype, -s, s) if proj_bias else None,
    }
    if qkv_bias:
        params["bq"] = jnp.zeros((dim,), dtype)
        params["bkv"] = jnp.zeros((2 * dim,), dtype)
    return params


def cross_attention(q, x, params, num_heads):
    """q: (B, n, C), x: (B, N, C) -> (B, n, C).  Single fused pallas_call."""
    B, n, C = q.shape
    _, N, _ = x.shape
    assert C % num_heads == 0
    head_dim = C // num_heads
    scale = head_dim ** (-0.5)
    dtype = q.dtype

    # Split the kv weight/bias into k / v halves once on the host side.
    # (PyTorch reshape(B, N, 2, H, d): first C output channels = k, last C = v.)
    wq, wkv, wproj = params["wq"], params["wkv"], params["wproj"]
    wk, wv = wkv[:, :C], wkv[:, C:]

    def _bias(b, width):
        # Missing bias == zero bias (same semantics as nn.Linear(bias=False)).
        if b is None:
            return jnp.zeros((1, width), dtype)
        return b.reshape(1, width)

    bq = _bias(params["bq"], C)
    bkv = params["bkv"]
    bk = _bias(None if bkv is None else bkv[:C], C)
    bv = _bias(None if bkv is None else bkv[C:], C)
    bp = _bias(params["bproj"], C)

    # Query tiling: full-n tile for small n, 128-row tiles when n is large.
    tq = 128 if (n >= 128 and n % 128 == 0) else n
    grid = (B, n // tq)

    kernel = functools.partial(_cross_attention_kernel, num_heads=num_heads,
                               head_dim=head_dim, scale=scale)

    w_spec = pl.BlockSpec((C, C), lambda b, i: (0, 0))
    b_spec = pl.BlockSpec((1, C), lambda b, i: (0, 0))

    return pl.pallas_call(
        kernel,
        out_shape=jax.ShapeDtypeStruct((B, n, C), dtype),
        grid=grid,
        in_specs=[
            pl.BlockSpec((1, tq, C), lambda b, i: (b, i, 0)),   # q
            pl.BlockSpec((1, N, C), lambda b, i: (b, 0, 0)),    # x (kv source)
            w_spec, w_spec, w_spec, w_spec,                     # wq, wk, wv, wproj
            b_spec, b_spec, b_spec, b_spec,                     # bq, bk, bv, bproj
        ],
        out_specs=pl.BlockSpec((1, tq, C), lambda b, i: (b, i, 0)),
        compiler_params=pltpu.CompilerParams(
            dimension_semantics=("parallel", "parallel")),
    )(q, x, wq, wk, wv, wproj, bq, bk, bv, bp)


# Pure-JAX reference for a sanity check.
def cross_attention_ref(q, x, params, num_heads):
    B, n, C = q.shape
    _, N, _ = x.shape
    d = C // num_heads
    scale = d ** (-0.5)
    qp = q.reshape(B * n, C) @ params["wq"]
    if params["bq"] is not None:
        qp = qp + params["bq"]
    kvp = x.reshape(B * N, C) @ params["wkv"]
    if params["bkv"] is not None:
        kvp = kvp + params["bkv"]
    qh = qp.reshape(B, n, num_heads, d).transpose(0, 2, 1, 3)
    kv = kvp.reshape(B, N, 2, num_heads, d).transpose(2, 0, 3, 1, 4)
    kh, vh = kv[0], kv[1]
    s = jnp.einsum("bhqd,bhkd->bhqk", qh, kh) * scale
    p = jax.nn.softmax(s, axis=-1)
    o = jnp.einsum("bhqk,bhkd->bhqd", p, vh)
    o = o.transpose(0, 2, 1, 3).reshape(B * n, C)
    o = o @ params["wproj"]
    if params["bproj"] is not None:
        o = o + params["bproj"]
    return o.reshape(B, n, C)


if __name__ == "__main__":
    key = jax.random.PRNGKey(0)
    kp, kq, kx = jax.random.split(key, 3)

    B, n, N, C, H = 2, 8, 16, 32, 4   # dim=32, num_heads=4 -> head_dim=8

    params = init_cross_attention_params(kp, C, qkv_bias=False, proj_bias=True)
    q_in = jax.random.normal(kq, (B, n, C), jnp.float32)
    x_in = jax.random.normal(kx, (B, N, C), jnp.float32)

    out = cross_attention(q_in, x_in, params, num_heads=H)
    out = jax.block_until_ready(out)

    ref = cross_attention_ref(q_in, x_in, params, num_heads=H)
    assert out.shape == (B, n, C)
    # Tolerance accounts for the approximate (EUP) softmax reciprocal.
    assert jnp.allclose(out, ref, atol=5e-3, rtol=5e-3), "mismatch vs reference"

    print("KERNEL_OK")
</pallas_src>

<mosaic_0001>
module attributes {stable_mosaic.version = 11 : i64} {
  func.func @_cross_attention_kernel(%arg0: i32, %arg1: i32, %arg2: memref<1x8x32xf32, #tpu.memory_space<vmem>>, %arg3: memref<1x16x32xf32, #tpu.memory_space<vmem>>, %arg4: memref<32x32xf32, #tpu.memory_space<vmem>>, %arg5: memref<32x32xf32, #tpu.memory_space<vmem>>, %arg6: memref<32x32xf32, #tpu.memory_space<vmem>>, %arg7: memref<32x32xf32, #tpu.memory_space<vmem>>, %arg8: memref<1x32xf32, #tpu.memory_space<vmem>>, %arg9: memref<1x32xf32, #tpu.memory_space<vmem>>, %arg10: memref<1x32xf32, #tpu.memory_space<vmem>>, %arg11: memref<1x32xf32, #tpu.memory_space<vmem>>, %arg12: memref<1x8x32xf32, #tpu.memory_space<vmem>>) attributes {dimension_semantics = [#tpu.dimension_semantics<parallel>, #tpu.dimension_semantics<parallel>], iteration_bounds = array<i64: 2, 1>, scalar_prefetch = 0 : i64, scratch_operands = 0 : i64, tpu.core_type = #tpu.core_type<tc>, window_params = [{transform_indices = @transform_0, window_bounds = array<i64: 1, 8, 32>}, {transform_indices = @transform_1, window_bounds = array<i64: 1, 16, 32>}, {pipeline_mode = #tpu.pipeline_mode<synchronous>, transform_indices = @transform_2, window_bounds = array<i64: 32, 32>}, {pipeline_mode = #tpu.pipeline_mode<synchronous>, transform_indices = @transform_3, window_bounds = array<i64: 32, 32>}, {pipeline_mode = #tpu.pipeline_mode<synchronous>, transform_indices = @transform_4, window_bounds = array<i64: 32, 32>}, {pipeline_mode = #tpu.pipeline_mode<synchronous>, transform_indices = @transform_5, window_bounds = array<i64: 32, 32>}, {pipeline_mode = #tpu.pipeline_mode<synchronous>, transform_indices = @transform_6, window_bounds = array<i64: 1, 32>}, {pipeline_mode = #tpu.pipeline_mode<synchronous>, transform_indices = @transform_7, window_bounds = array<i64: 1, 32>}, {pipeline_mode = #tpu.pipeline_mode<synchronous>, transform_indices = @transform_8, window_bounds = array<i64: 1, 32>}, {pipeline_mode = #tpu.pipeline_mode<synchronous>, transform_indices = @transform_9, window_bounds = array<i64: 1, 32>}, {transform_indices = @transform_10, window_bounds = array<i64: 1, 8, 32>}]} {
    %c0 = arith.constant 0 : index
    %c0_0 = arith.constant 0 : index
    %c0_1 = arith.constant 0 : index
    %0 = vector.load %arg2[%c0, %c0_0, %c0_1] : memref<1x8x32xf32, #tpu.memory_space<vmem>>, vector<1x8x32xf32>
    %1 = vector.shape_cast %0 : vector<1x8x32xf32> to vector<8x32xf32>
    %c0_2 = arith.constant 0 : index
    %c0_3 = arith.constant 0 : index
    %c0_4 = arith.constant 0 : index
    %2 = vector.load %arg3[%c0_2, %c0_3, %c0_4] : memref<1x16x32xf32, #tpu.memory_space<vmem>>, vector<1x16x32xf32>
    %3 = vector.shape_cast %2 : vector<1x16x32xf32> to vector<16x32xf32>
    %cst = arith.constant 0.000000e+00 : f32
    %4 = vector.broadcast %cst : f32 to vector<8x32xf32>
    %c0_5 = arith.constant 0 : index
    %c0_6 = arith.constant 0 : index
    %5 = vector.load %arg4[%c0_5, %c0_6] : memref<32x32xf32, #tpu.memory_space<vmem>>, vector<32x8xf32>
    %cst_7 = arith.constant dense<0.000000e+00> : vector<8x8xf32>
    %6 = tpu.matmul %1, %5, %cst_7 {dimension_numbers = #tpu.dot_dimension_numbers<[1], [0], [0], [1], [0, 0, 1, 1], [], []>} : vector<8x32xf32>, vector<32x8xf32>, vector<8x8xf32> -> vector<8x8xf32>
    %c0_8 = arith.constant 0 : index
    %c0_9 = arith.constant 0 : index
    %7 = vector.load %arg8[%c0_8, %c0_9] : memref<1x32xf32, #tpu.memory_space<vmem>>, vector<1x8xf32>
    %8 = vector.broadcast %7 : vector<1x8xf32> to vector<8x8xf32>
    %9 = arith.addf %6, %8 : vector<8x8xf32>
    %cst_10 = arith.constant 0.353553385 : f32
    %10 = vector.broadcast %cst_10 : f32 to vector<8x8xf32>
    %11 = arith.mulf %9, %10 : vector<8x8xf32>
    %c0_11 = arith.constant 0 : index
    %c0_12 = arith.constant 0 : index
    %12 = vector.load %arg5[%c0_11, %c0_12] : memref<32x32xf32, #tpu.memory_space<vmem>>, vector<32x8xf32>
    %cst_13 = arith.constant dense<0.000000e+00> : vector<16x8xf32>
    %13 = tpu.matmul %3, %12, %cst_13 {dimension_numbers = #tpu.dot_dimension_numbers<[1], [0], [0], [1], [0, 0, 1, 1], [], []>} : vector<16x32xf32>, vector<32x8xf32>, vector<16x8xf32> -> vector<16x8xf32>
    %c0_14 = arith.constant 0 : index
    %c0_15 = arith.constant 0 : index
    %14 = vector.load %arg9[%c0_14, %c0_15] : memref<1x32xf32, #tpu.memory_space<vmem>>, vector<1x8xf32>
    %15 = vector.broadcast %14 : vector<1x8xf32> to vector<16x8xf32>
    %16 = arith.addf %13, %15 : vector<16x8xf32>
    %c0_16 = arith.constant 0 : index
    %c0_17 = arith.constant 0 : index
    %17 = vector.load %arg6[%c0_16, %c0_17] : memref<32x32xf32, #tpu.memory_space<vmem>>, vector<32x8xf32>
    %cst_18 = arith.constant dense<0.000000e+00> : vector<16x8xf32>
    %18 = tpu.matmul %3, %17, %cst_18 {dimension_numbers = #tpu.dot_dimension_numbers<[1], [0], [0], [1], [0, 0, 1, 1], [], []>} : vector<16x32xf32>, vector<32x8xf32>, vector<16x8xf32> -> vector<16x8xf32>
    %c0_19 = arith.constant 0 : index
    %c0_20 = arith.constant 0 : index
    %19 = vector.load %arg10[%c0_19, %c0_20] : memref<1x32xf32, #tpu.memory_space<vmem>>, vector<1x8xf32>
    %20 = vector.broadcast %19 : vector<1x8xf32> to vector<16x8xf32>
    %21 = arith.addf %18, %20 : vector<16x8xf32>
    %cst_21 = arith.constant dense<0.000000e+00> : vector<8x16xf32>
    %22 = tpu.matmul %11, %16, %cst_21 {dimension_numbers = #tpu.dot_dimension_numbers<[1], [1], [0], [0], [0, 0, 1, 0], [], []>} : vector<8x8xf32>, vector<16x8xf32>, vector<8x16xf32> -> vector<8x16xf32>
    %cst_22 = arith.constant dense<0xFF800000> : vector<8xf32>
    %23 = vector.multi_reduction <maximumf>, %22, %cst_22 [1] : vector<8x16xf32> to vector<8xf32>
    %24 = vector.shape_cast %23 : vector<8xf32> to vector<8x1xf32>
    %25 = vector.broadcast %24 : vector<8x1xf32> to vector<8x16xf32>
    %26 = arith.subf %22, %25 : vector<8x16xf32>
    %27 = math.exp %26 : vector<8x16xf32>
    %cst_23 = arith.constant dense<0.000000e+00> : vector<8xf32>
    %28 = vector.multi_reduction <add>, %27, %cst_23 [1] : vector<8x16xf32> to vector<8xf32>
    %29 = vector.shape_cast %28 : vector<8xf32> to vector<8x1xf32>
    %30 = tpu.reciprocal %29 {approx = true} : vector<8x1xf32> -> vector<8x1xf32>
    %31 = vector.broadcast %30 : vector<8x1xf32> to vector<8x16xf32>
    %32 = arith.mulf %27, %31 : vector<8x16xf32>
    %cst_24 = arith.constant dense<0.000000e+00> : vector<8x8xf32>
    %33 = tpu.matmul %32, %21, %cst_24 {dimension_numbers = #tpu.dot_dimension_numbers<[1], [0], [0], [1], [0, 0, 1, 1], [], []>} : vector<8x16xf32>, vector<16x8xf32>, vector<8x8xf32> -> vector<8x8xf32>
    %c0_25 = arith.constant 0 : index
    %c0_26 = arith.constant 0 : index
    %34 = vector.load %arg7[%c0_25, %c0_26] : memref<32x32xf32, #tpu.memory_space<vmem>>, vector<8x32xf32>
    %cst_27 = arith.constant dense<0.000000e+00> : vector<8x32xf32>
    %35 = tpu.matmul %33, %34, %cst_27 {dimension_numbers = #tpu.dot_dimension_numbers<[1], [0], [0], [1], [0, 0, 1, 1], [], []>} : vector<8x8xf32>, vector<8x32xf32>, vector<8x32xf32> -> vector<8x32xf32>
    %36 = arith.addf %4, %35 : vector<8x32xf32>
    %c0_28 = arith.constant 0 : index
    %c8 = arith.constant 8 : index
    %37 = vector.load %arg4[%c0_28, %c8] : memref<32x32xf32, #tpu.memory_space<vmem>>, vector<32x8xf32>
    %cst_29 = arith.constant dense<0.000000e+00> : vector<8x8xf32>
    %38 = tpu.matmul %1, %37, %cst_29 {dimension_numbers = #tpu.dot_dimension_numbers<[1], [0], [0], [1], [0, 0, 1, 1], [], []>} : vector<8x32xf32>, vector<32x8xf32>, vector<8x8xf32> -> vector<8x8xf32>
    %c0_30 = arith.constant 0 : index
    %c8_31 = arith.constant 8 : index
    %39 = vector.load %arg8[%c0_30, %c8_31] : memref<1x32xf32, #tpu.memory_space<vmem>>, vector<1x8xf32>
    %40 = vector.broadcast %39 : vector<1x8xf32> to vector<8x8xf32>
    %41 = arith.addf %38, %40 : vector<8x8xf32>
    %cst_32 = arith.constant 0.353553385 : f32
    %42 = vector.broadcast %cst_32 : f32 to vector<8x8xf32>
    %43 = arith.mulf %41, %42 : vector<8x8xf32>
    %c0_33 = arith.constant 0 : index
    %c8_34 = arith.constant 8 : index
    %44 = vector.load %arg5[%c0_33, %c8_34] : memref<32x32xf32, #tpu.memory_space<vmem>>, vector<32x8xf32>
    %cst_35 = arith.constant dense<0.000000e+00> : vector<16x8xf32>
    %45 = tpu.matmul %3, %44, %cst_35 {dimension_numbers = #tpu.dot_dimension_numbers<[1], [0], [0], [1], [0, 0, 1, 1], [], []>} : vector<16x32xf32>, vector<32x8xf32>, vector<16x8xf32> -> vector<16x8xf32>
    %c0_36 = arith.constant 0 : index
    %c8_37 = arith.constant 8 : index
    %46 = vector.load %arg9[%c0_36, %c8_37] : memref<1x32xf32, #tpu.memory_space<vmem>>, vector<1x8xf32>
    %47 = vector.broadcast %46 : vector<1x8xf32> to vector<16x8xf32>
    %48 = arith.addf %45, %47 : vector<16x8xf32>
    %c0_38 = arith.constant 0 : index
    %c8_39 = arith.constant 8 : index
    %49 = vector.load %arg6[%c0_38, %c8_39] : memref<32x32xf32, #tpu.memory_space<vmem>>, vector<32x8xf32>
    %cst_40 = arith.constant dense<0.000000e+00> : vector<16x8xf32>
    %50 = tpu.matmul %3, %49, %cst_40 {dimension_numbers = #tpu.dot_dimension_numbers<[1], [0], [0], [1], [0, 0, 1, 1], [], []>} : vector<16x32xf32>, vector<32x8xf32>, vector<16x8xf32> -> vector<16x8xf32>
    %c0_41 = arith.constant 0 : index
    %c8_42 = arith.constant 8 : index
    %51 = vector.load %arg10[%c0_41, %c8_42] : memref<1x32xf32, #tpu.memory_space<vmem>>, vector<1x8xf32>
    %52 = vector.broadcast %51 : vector<1x8xf32> to vector<16x8xf32>
    %53 = arith.addf %50, %52 : vector<16x8xf32>
    %cst_43 = arith.constant dense<0.000000e+00> : vector<8x16xf32>
    %54 = tpu.matmul %43, %48, %cst_43 {dimension_numbers = #tpu.dot_dimension_numbers<[1], [1], [0], [0], [0, 0, 1, 0], [], []>} : vector<8x8xf32>, vector<16x8xf32>, vector<8x16xf32> -> vector<8x16xf32>
    %cst_44 = arith.constant dense<0xFF800000> : vector<8xf32>
    %55 = vector.multi_reduction <maximumf>, %54, %cst_44 [1] : vector<8x16xf32> to vector<8xf32>
    %56 = vector.shape_cast %55 : vector<8xf32> to vector<8x1xf32>
    %57 = vector.broadcast %56 : vector<8x1xf32> to vector<8x16xf32>
    %58 = arith.subf %54, %57 : vector<8x16xf32>
    %59 = math.exp %58 : vector<8x16xf32>
    %cst_45 = arith.constant dense<0.000000e+00> : vector<8xf32>
    %60 = vector.multi_reduction <add>, %59, %cst_45 [1] : vector<8x16xf32> to vector<8xf32>
    %61 = vector.shape_cast %60 : vector<8xf32> to vector<8x1xf32>
    %62 = tpu.reciprocal %61 {approx = true} : vector<8x1xf32> -> vector<8x1xf32>
    %63 = vector.broadcast %62 : vector<8x1xf32> to vector<8x16xf32>
    %64 = arith.mulf %59, %63 : vector<8x16xf32>
    %cst_46 = arith.constant dense<0.000000e+00> : vector<8x8xf32>
    %65 = tpu.matmul %64, %53, %cst_46 {dimension_numbers = #tpu.dot_dimension_numbers<[1], [0], [0], [1], [0, 0, 1, 1], [], []>} : vector<8x16xf32>, vector<16x8xf32>, vector<8x8xf32> -> vector<8x8xf32>
    %c8_47 = arith.constant 8 : index
    %c0_48 = arith.constant 0 : index
    %66 = vector.load %arg7[%c8_47, %c0_48] : memref<32x32xf32, #tpu.memory_space<vmem>>, vector<8x32xf32>
    %cst_49 = arith.constant dense<0.000000e+00> : vector<8x32xf32>
    %67 = tpu.matmul %65, %66, %cst_49 {dimension_numbers = #tpu.dot_dimension_numbers<[1], [0], [0], [1], [0, 0, 1, 1], [], []>} : vector<8x8xf32>, vector<8x32xf32>, vector<8x32xf32> -> vector<8x32xf32>
    %68 = arith.addf %36, %67 : vector<8x32xf32>
    %c0_50 = arith.constant 0 : index
    %c16 = arith.constant 16 : index
    %69 = vector.load %arg4[%c0_50, %c16] : memref<32x32xf32, #tpu.memory_space<vmem>>, vector<32x8xf32>
    %cst_51 = arith.constant dense<0.000000e+00> : vector<8x8xf32>
    %70 = tpu.matmul %1, %69, %cst_51 {dimension_numbers = #tpu.dot_dimension_numbers<[1], [0], [0], [1], [0, 0, 1, 1], [], []>} : vector<8x32xf32>, vector<32x8xf32>, vector<8x8xf32> -> vector<8x8xf32>
    %c0_52 = arith.constant 0 : index
    %c16_53 = arith.constant 16 : index
    %71 = vector.load %arg8[%c0_52, %c16_53] : memref<1x32xf32, #tpu.memory_space<vmem>>, vector<1x8xf32>
    %72 = vector.broadcast %71 : vector<1x8xf32> to vector<8x8xf32>
    %73 = arith.addf %70, %72 : vector<8x8xf32>
    %cst_54 = arith.constant 0.353553385 : f32
    %74 = vector.broadcast %cst_54 : f32 to vector<8x8xf32>
    %75 = arith.mulf %73, %74 : vector<8x8xf32>
    %c0_55 = arith.constant 0 : index
    %c16_56 = arith.constant 16 : index
    %76 = vector.load %arg5[%c0_55, %c16_56] : memref<32x32xf32, #tpu.memory_space<vmem>>, vector<32x8xf32>
    %cst_57 = arith.constant dense<0.000000e+00> : vector<16x8xf32>
    %77 = tpu.matmul %3, %76, %cst_57 {dimension_numbers = #tpu.dot_dimension_numbers<[1], [0], [0], [1], [0, 0, 1, 1], [], []>} : vector<16x32xf32>, vector<32x8xf32>, vector<16x8xf32> -> vector<16x8xf32>
    %c0_58 = arith.constant 0 : index
    %c16_59 = arith.constant 16 : index
    %78 = vector.load %arg9[%c0_58, %c16_59] : memref<1x32xf32, #tpu.memory_space<vmem>>, vector<1x8xf32>
    %79 = vector.broadcast %78 : vector<1x8xf32> to vector<16x8xf32>
    %80 = arith.addf %77, %79 : vector<16x8xf32>
    %c0_60 = arith.constant 0 : index
    %c16_61 = arith.constant 16 : index
    %81 = vector.load %arg6[%c0_60, %c16_61] : memref<32x32xf32, #tpu.memory_space<vmem>>, vector<32x8xf32>
    %cst_62 = arith.constant dense<0.000000e+00> : vector<16x8xf32>
    %82 = tpu.matmul %3, %81, %cst_62 {dimension_numbers = #tpu.dot_dimension_numbers<[1], [0], [0], [1], [0, 0, 1, 1], [], []>} : vector<16x32xf32>, vector<32x8xf32>, vector<16x8xf32> -> vector<16x8xf32>
    %c0_63 = arith.constant 0 : index
    %c16_64 = arith.constant 16 : index
    %83 = vector.load %arg10[%c0_63, %c16_64] : memref<1x32xf32, #tpu.memory_space<vmem>>, vector<1x8xf32>
    %84 = vector.broadcast %83 : vector<1x8xf32> to vector<16x8xf32>
    %85 = arith.addf %82, %84 : vector<16x8xf32>
    %cst_65 = arith.constant dense<0.000000e+00> : vector<8x16xf32>
    %86 = tpu.matmul %75, %80, %cst_65 {dimension_numbers = #tpu.dot_dimension_numbers<[1], [1], [0], [0], [0, 0, 1, 0], [], []>} : vector<8x8xf32>, vector<16x8xf32>, vector<8x16xf32> -> vector<8x16xf32>
    %cst_66 = arith.constant dense<0xFF800000> : vector<8xf32>
    %87 = vector.multi_reduction <maximumf>, %86, %cst_66 [1] : vector<8x16xf32> to vector<8xf32>
    %88 = vector.shape_cast %87 : vector<8xf32> to vector<8x1xf32>
    %89 = vector.broadcast %88 : vector<8x1xf32> to vector<8x16xf32>
    %90 = arith.subf %86, %89 : vector<8x16xf32>
    %91 = math.exp %90 : vector<8x16xf32>
    %cst_67 = arith.constant dense<0.000000e+00> : vector<8xf32>
    %92 = vector.multi_reduction <add>, %91, %cst_67 [1] : vector<8x16xf32> to vector<8xf32>
    %93 = vector.shape_cast %92 : vector<8xf32> to vector<8x1xf32>
    %94 = tpu.reciprocal %93 {approx = true} : vector<8x1xf32> -> vector<8x1xf32>
    %95 = vector.broadcast %94 : vector<8x1xf32> to vector<8x16xf32>
    %96 = arith.mulf %91, %95 : vector<8x16xf32>
    %cst_68 = arith.constant dense<0.000000e+00> : vector<8x8xf32>
    %97 = tpu.matmul %96, %85, %cst_68 {dimension_numbers = #tpu.dot_dimension_numbers<[1], [0], [0], [1], [0, 0, 1, 1], [], []>} : vector<8x16xf32>, vector<16x8xf32>, vector<8x8xf32> -> vector<8x8xf32>
    %c16_69 = arith.constant 16 : index
    %c0_70 = arith.constant 0 : index
    %98 = vector.load %arg7[%c16_69, %c0_70] : memref<32x32xf32, #tpu.memory_space<vmem>>, vector<8x32xf32>
    %cst_71 = arith.constant dense<0.000000e+00> : vector<8x32xf32>
    %99 = tpu.matmul %97, %98, %cst_71 {dimension_numbers = #tpu.dot_dimension_numbers<[1], [0], [0], [1], [0, 0, 1, 1], [], []>} : vector<8x8xf32>, vector<8x32xf32>, vector<8x32xf32> -> vector<8x32xf32>
    %100 = arith.addf %68, %99 : vector<8x32xf32>
    %c0_72 = arith.constant 0 : index
    %c24 = arith.constant 24 : index
    %101 = vector.load %arg4[%c0_72, %c24] : memref<32x32xf32, #tpu.memory_space<vmem>>, vector<32x8xf32>
    %cst_73 = arith.constant dense<0.000000e+00> : vector<8x8xf32>
    %102 = tpu.matmul %1, %101, %cst_73 {dimension_numbers = #tpu.dot_dimension_numbers<[1], [0], [0], [1], [0, 0, 1, 1], [], []>} : vector<8x32xf32>, vector<32x8xf32>, vector<8x8xf32> -> vector<8x8xf32>
    %c0_74 = arith.constant 0 : index
    %c24_75 = arith.constant 24 : index
    %103 = vector.load %arg8[%c0_74, %c24_75] : memref<1x32xf32, #tpu.memory_space<vmem>>, vector<1x8xf32>
    %104 = vector.broadcast %103 : vector<1x8xf32> to vector<8x8xf32>
    %105 = arith.addf %102, %104 : vector<8x8xf32>
    %cst_76 = arith.constant 0.353553385 : f32
    %106 = vector.broadcast %cst_76 : f32 to vector<8x8xf32>
    %107 = arith.mulf %105, %106 : vector<8x8xf32>
    %c0_77 = arith.constant 0 : index
    %c24_78 = arith.constant 24 : index
    %108 = vector.load %arg5[%c0_77, %c24_78] : memref<32x32xf32, #tpu.memory_space<vmem>>, vector<32x8xf32>
    %cst_79 = arith.constant dense<0.000000e+00> : vector<16x8xf32>
    %109 = tpu.matmul %3, %108, %cst_79 {dimension_numbers = #tpu.dot_dimension_numbers<[1], [0], [0], [1], [0, 0, 1, 1], [], []>} : vector<16x32xf32>, vector<32x8xf32>, vector<16x8xf32> -> vector<16x8xf32>
    %c0_80 = arith.constant 0 : index
    %c24_81 = arith.constant 24 : index
    %110 = vector.load %arg9[%c0_80, %c24_81] : memref<1x32xf32, #tpu.memory_space<vmem>>, vector<1x8xf32>
    %111 = vector.broadcast %110 : vector<1x8xf32> to vector<16x8xf32>
    %112 = arith.addf %109, %111 : vector<16x8xf32>
    %c0_82 = arith.constant 0 : index
    %c24_83 = arith.constant 24 : index
    %113 = vector.load %arg6[%c0_82, %c24_83] : memref<32x32xf32, #tpu.memory_space<vmem>>, vector<32x8xf32>
    %cst_84 = arith.constant dense<0.000000e+00> : vector<16x8xf32>
    %114 = tpu.matmul %3, %113, %cst_84 {dimension_numbers = #tpu.dot_dimension_numbers<[1], [0], [0], [1], [0, 0, 1, 1], [], []>} : vector<16x32xf32>, vector<32x8xf32>, vector<16x8xf32> -> vector<16x8xf32>
    %c0_85 = arith.constant 0 : index
    %c24_86 = arith.constant 24 : index
    %115 = vector.load %arg10[%c0_85, %c24_86] : memref<1x32xf32, #tpu.memory_space<vmem>>, vector<1x8xf32>
    %116 = vector.broadcast %115 : vector<1x8xf32> to vector<16x8xf32>
    %117 = arith.addf %114, %116 : vector<16x8xf32>
    %cst_87 = arith.constant dense<0.000000e+00> : vector<8x16xf32>
    %118 = tpu.matmul %107, %112, %cst_87 {dimension_numbers = #tpu.dot_dimension_numbers<[1], [1], [0], [0], [0, 0, 1, 0], [], []>} : vector<8x8xf32>, vector<16x8xf32>, vector<8x16xf32> -> vector<8x16xf32>
    %cst_88 = arith.constant dense<0xFF800000> : vector<8xf32>
    %119 = vector.multi_reduction <maximumf>, %118, %cst_88 [1] : vector<8x16xf32> to vector<8xf32>
    %120 = vector.shape_cast %119 : vector<8xf32> to vector<8x1xf32>
    %121 = vector.broadcast %120 : vector<8x1xf32> to vector<8x16xf32>
    %122 = arith.subf %118, %121 : vector<8x16xf32>
    %123 = math.exp %122 : vector<8x16xf32>
    %cst_89 = arith.constant dense<0.000000e+00> : vector<8xf32>
    %124 = vector.multi_reduction <add>, %123, %cst_89 [1] : vector<8x16xf32> to vector<8xf32>
    %125 = vector.shape_cast %124 : vector<8xf32> to vector<8x1xf32>
    %126 = tpu.reciprocal %125 {approx = true} : vector<8x1xf32> -> vector<8x1xf32>
    %127 = vector.broadcast %126 : vector<8x1xf32> to vector<8x16xf32>
    %128 = arith.mulf %123, %127 : vector<8x16xf32>
    %cst_90 = arith.constant dense<0.000000e+00> : vector<8x8xf32>
    %129 = tpu.matmul %128, %117, %cst_90 {dimension_numbers = #tpu.dot_dimension_numbers<[1], [0], [0], [1], [0, 0, 1, 1], [], []>} : vector<8x16xf32>, vector<16x8xf32>, vector<8x8xf32> -> vector<8x8xf32>
    %c24_91 = arith.constant 24 : index
    %c0_92 = arith.constant 0 : index
    %130 = vector.load %arg7[%c24_91, %c0_92] : memref<32x32xf32, #tpu.memory_space<vmem>>, vector<8x32xf32>
    %cst_93 = arith.constant dense<0.000000e+00> : vector<8x32xf32>
    %131 = tpu.matmul %129, %130, %cst_93 {dimension_numbers = #tpu.dot_dimension_numbers<[1], [0], [0], [1], [0, 0, 1, 1], [], []>} : vector<8x8xf32>, vector<8x32xf32>, vector<8x32xf32> -> vector<8x32xf32>
    %132 = arith.addf %100, %131 : vector<8x32xf32>
    %c0_94 = arith.constant 0 : index
    %c0_95 = arith.constant 0 : index
    %133 = vector.load %arg11[%c0_94, %c0_95] : memref<1x32xf32, #tpu.memory_space<vmem>>, vector<1x32xf32>
    %134 = vector.broadcast %133 : vector<1x32xf32> to vector<8x32xf32>
    %135 = arith.addf %132, %134 : vector<8x32xf32>
    %c0_96 = arith.constant 0 : index
    %c0_97 = arith.constant 0 : index
    %c0_98 = arith.constant 0 : index
    %136 = vector.load %arg12[%c0_96, %c0_97, %c0_98] : memref<1x8x32xf32, #tpu.memory_space<vmem>>, vector<1x8x32xf32>
    %137 = vector.shape_cast %136 : vector<1x8x32xf32> to vector<8x32xf32>
    %138 = vector.shape_cast %135 : vector<8x32xf32> to vector<1x8x32xf32>
    tpu.vector_store %arg12[%c0_96, %c0_97, %c0_98], %138 {strides = array<i32>} : memref<1x8x32xf32, #tpu.memory_space<vmem>>, vector<1x8x32xf32>,
    return
  }
  func.func @transform_0(%arg0: i32, %arg1: i32) -> (i32, i32, i32) {
    %c0_i32 = arith.constant 0 : i32
    %c0_i32_0 = arith.constant 0 : i32
    return %arg0, %arg1, %c0_i32 : i32, i32, i32
  }
  func.func @transform_1(%arg0: i32, %arg1: i32) -> (i32, i32, i32) {
    %c0_i32 = arith.constant 0 : i32
    %c0_i32_0 = arith.constant 0 : i32
    %c0_i32_1 = arith.constant 0 : i32
    return %arg0, %c0_i32, %c0_i32_0 : i32, i32, i32
  }
  func.func @transform_2(%arg0: i32, %arg1: i32) -> (i32, i32) {
    %c0_i32 = arith.constant 0 : i32
    %c0_i32_0 = arith.constant 0 : i32
    %c0_i32_1 = arith.constant 0 : i32
    return %c0_i32, %c0_i32_0 : i32, i32
  }
  func.func @transform_3(%arg0: i32, %arg1: i32) -> (i32, i32) {
    %c0_i32 = arith.constant 0 : i32
    %c0_i32_0 = arith.constant 0 : i32
    %c0_i32_1 = arith.constant 0 : i32
    return %c0_i32, %c0_i32_0 : i32, i32
  }
  func.func @transform_4(%arg0: i32, %arg1: i32) -> (i32, i32) {
    %c0_i32 = arith.constant 0 : i32
    %c0_i32_0 = arith.constant 0 : i32
    %c0_i32_1 = arith.constant 0 : i32
    return %c0_i32, %c0_i32_0 : i32, i32
  }
  func.func @transform_5(%arg0: i32, %arg1: i32) -> (i32, i32) {
    %c0_i32 = arith.constant 0 : i32
    %c0_i32_0 = arith.constant 0 : i32
    %c0_i32_1 = arith.constant 0 : i32
    return %c0_i32, %c0_i32_0 : i32, i32
  }
  func.func @transform_6(%arg0: i32, %arg1: i32) -> (i32, i32) {
    %c0_i32 = arith.constant 0 : i32
    %c0_i32_0 = arith.constant 0 : i32
    %c0_i32_1 = arith.constant 0 : i32
    return %c0_i32, %c0_i32_0 : i32, i32
  }
  func.func @transform_7(%arg0: i32, %arg1: i32) -> (i32, i32) {
    %c0_i32 = arith.constant 0 : i32
    %c0_i32_0 = arith.constant 0 : i32
    %c0_i32_1 = arith.constant 0 : i32
    return %c0_i32, %c0_i32_0 : i32, i32
  }
  func.func @transform_8(%arg0: i32, %arg1: i32) -> (i32, i32) {
    %c0_i32 = arith.constant 0 : i32
    %c0_i32_0 = arith.constant 0 : i32
    %c0_i32_1 = arith.constant 0 : i32
    return %c0_i32, %c0_i32_0 : i32, i32
  }
  func.func @transform_9(%arg0: i32, %arg1: i32) -> (i32, i32) {
    %c0_i32 = arith.constant 0 : i32
    %c0_i32_0 = arith.constant 0 : i32
    %c0_i32_1 = arith.constant 0 : i32
    return %c0_i32, %c0_i32_0 : i32, i32
  }
  func.func @transform_10(%arg0: i32, %arg1: i32) -> (i32, i32, i32) {
    %c0_i32 = arith.constant 0 : i32
    %c0_i32_0 = arith.constant 0 : i32
    return %arg0, %arg1, %c0_i32 : i32, i32, i32
  }
}

</mosaic_0001>

<llo_original>
// kernel: tpu_custom_call.1
$region0: #{tpu_custom_call.1}
  #allocation0 [shape = 'u32[]', space=smem, size = 0x4, offset = 0x4, fixed_abs, tag = 'smem constant byte address 0x4 - core index']
  #allocation1 [shape = 'u32[72,128]{1,0:T(1,128)}', space=vmem, size = 0x9000, scoped, tag = 'internal scratch']
  %s0 = inlined_call_operand.hbm [shape: f32[2,8,32], index: 0, kind: input, shape index: {}]
  %s1 = inlined_call_operand.hbm [shape: f32[2,16,32], index: 1, kind: input, shape index: {}]
  %s2 = inlined_call_operand.hbm [shape: f32[32,32], index: 2, kind: input, shape index: {}]
  %s3 = inlined_call_operand.hbm [shape: f32[32,32], index: 3, kind: input, shape index: {}]
  %s4 = inlined_call_operand.hbm [shape: f32[32,32], index: 4, kind: input, shape index: {}]
  %s5 = inlined_call_operand.hbm [shape: f32[32,32], index: 5, kind: input, shape index: {}]
  %s6 = inlined_call_operand.vmem [shape: f32[1,32], index: 6, kind: input, shape index: {}]
  %s7 = inlined_call_operand.vmem [shape: f32[1,32], index: 7, kind: input, shape index: {}]
  %s8 = inlined_call_operand.vmem [shape: f32[1,32], index: 8, kind: input, shape index: {}]
  %s9 = inlined_call_operand.vmem [shape: f32[1,32], index: 9, kind: input, shape index: {}]
  %s10 = inlined_call_operand.hbm [shape: f32[2,8,32], index: 10, kind: output, shape index: {}]
  %s11 = sld [smem:[#allocation0]]
  $region97: #{tpu_custom_call.1} parent=0
    _
  %s13 = ssub.s32 1, %s11
  %s14 = scalar_select 0, %s13, %s11
  $region1: #{tpu_custom_call.1} parent=0
    #allocation2 [shape = 'u8[8192]{0}', space=vmem, size = 0x2000, scoped, tag = 'input window, operand 0']
    #allocation3 [shape = 's32[2]{0}', space=sflag, size = 0x8, scoped, tag = 'scoped memory for tpu_custom_call.1']
    #allocation4 [shape = 's32[2]{0}', space=sflag, size = 0x8, scoped, tag = 'scoped memory for tpu_custom_call.1']
    #allocation5 [shape = 'u8[16384]{0}', space=vmem, size = 0x4000, scoped, tag = 'input window, operand 1']
    #allocation6 [shape = 's32[2]{0}', space=sflag, size = 0x8, scoped, tag = 'scoped memory for tpu_custom_call.1']
    #allocation7 [shape = 'u8[16384]{0}', space=vmem, size = 0x4000, scoped, tag = 'input window, operand 2, single buffered']
    #allocation8 [shape = 'u8[16384]{0}', space=vmem, size = 0x4000, scoped, tag = 'input window, operand 3, single buffered']
    #allocation9 [shape = 's32[1]{0}', space=sflag, size = 0x4, scoped, tag = 'scoped memory for tpu_custom_call.1']
    #allocation10 [shape = 'u8[16384]{0}', space=vmem, size = 0x4000, scoped, tag = 'input window, operand 4, single buffered']
    #allocation11 [shape = 'u8[16384]{0}', space=vmem, size = 0x4000, scoped, tag = 'input window, operand 5, single buffered']
    #allocation12 [shape = 's32[1]{0}', space=sflag, size = 0x4, scoped, tag = 'scoped memory for tpu_custom_call.1']
    #allocation13 [shape = 'u8[8192]{0}', space=vmem, size = 0x2000, scoped, tag = 'output window, operand 0']
    %15 = vsyncpa [#allocation3], 0
    %s16 = scalar_lea.sflag [#allocation3], 1
    %17 = vsyncpa %s16, 0
    %18 = vsyncpa [#allocation6], 0
    %s19 = scalar_lea.sflag [#allocation6], 1
    %20 = vsyncpa %s19, 0
    %21 = vsyncpa [#allocation9], 0
    %22 = vsyncpa [#allocation12], 0
    %23 = vsyncpa [#allocation4], 0
    %s24 = scalar_lea.sflag [#allocation4], 1
    %25 = vsyncpa %s24, 0
    loop: start=0, step=1, limit=4
    $region2: #{tpu_custom_call.1} parent=1 // loop_pre_header
      _
    $region3: #{tpu_custom_call.1} parent=1 // loop_header
      %s27 = sphi 0, %s31
      %p28 = scmp.ge.s32.totalorder %s27, 4
      %s34 = sphi 0, %s46
      %s35 = sphi 0, %s42
      %s36 = sphi 0, %s34
      %s37 = sphi 0, %s35
      %s38 = sphi 0, %s36
      %s39 = sphi 0, %s37
      %s51 = sphi 0, %s53
      %s54 = sphi 0, %s51
      %s55 = sphi 0, %s54
      %s71 = sphi 0, %s55
      %s77 = sphi 0, %s79
      %s80 = sphi 0, %s77
      %s81 = sphi 0, %s80
      %s97 = sphi 0, %s81
      %s101 = sphi 0, %s101
      %s103 = sphi 0, %s101
      %s104 = sphi 0, %s103
      %s118 = sphi 0, %s104
      %s122 = sphi 0, %s122
      %s124 = sphi 0, %s122
      %s125 = sphi 0, %s124
      %s139 = sphi 0, %s125
      %s143 = sphi 0, %s143
      %s145 = sphi 0, %s143
      %s146 = sphi 0, %s145
      %s160 = sphi 0, %s146
      %s164 = sphi 0, %s164
      %s166 = sphi 0, %s164
      %s167 = sphi 0, %s166
      %s181 = sphi 0, %s167
      %s185 = sphi 0, %s185
      %s187 = sphi 0, %s185
      %s188 = sphi 0, %s187
      %s202 = sphi 0, %s188
      %s206 = sphi 0, %s206
      %s208 = sphi 0, %s206
      %s209 = sphi 0, %s208
      %s223 = sphi 0, %s209
      %s227 = sphi 0, %s227
      %s229 = sphi 0, %s227
      %s230 = sphi 0, %s229
      %s244 = sphi 0, %s230
      %s248 = sphi 0, %s248
      %s250 = sphi 0, %s248
      %s251 = sphi 0, %s250
      %s265 = sphi 0, %s251
      %s273 = sphi 0, %s275
      %s276 = sphi 0, %s273
      %s277 = sphi 0, %s276
      %s293 = sphi 0, %s277
    $region4: #{tpu_custom_call.1} parent=1 // loop_header_branch
      %30 = sbr.rel (%p28) target = $region8
    $region5: #{tpu_custom_call.1} parent=1 // loop_body
      %s32 = ssub.s32 %s27, 1
      %s33 = ssub.s32 %s27, 2
      %s40 = sadd.s32 1, %s35
      %p41 = scmp.ge.s32.totalorder %s40, 1
      %s42 = scalar_select %p41, 0, %s40
      %s43 = sadd.s32 1, %s34
      %s44 = scalar_select %p41, %s43, %s34
      %p45 = scmp.ge.s32.totalorder %s44, 2
      %s46 = scalar_select %p45, 0, %s44
      %s47 = ssub.s32 %s34, %s46
      %s48 = ssub.s32 %s35, %s42
      %s49 = sor.u32 %s47, %s48
      %p50 = scmp.eq.s32.totalorder %s49, 0
      %s52 = sadd.s32 %s51, 1
      %s53 = scalar_select %p50, %s51, %s52
      %p56 = pneg %p50
      %p57 = scmp.eq.s32.totalorder %s27, 1
      %p58 = por %p56, %p57
      %p59 = scmp.ne.s32.totalorder %s51, %s54
      %p60 = scmp.eq.s32.totalorder %s27, 0
      %p61 = por %p59, %p60
      %p62 = scmp.ne.s32.totalorder %s51, %s54
      %p63 = scmp.eq.s32.totalorder %s32, 1
      %p64 = por %p62, %p63
      %p65 = scmp.ne.s32.totalorder %s54, %s55
      %p66 = scmp.eq.s32.totalorder %s32, 0
      %p67 = por %p65, %p66
      %p68 = scmp.ne.s32.totalorder %s54, %s55
      %p69 = scmp.eq.s32.totalorder %s33, 1
      %p70 = por %p68, %p69
      %p72 = scmp.ne.s32.totalorder %s55, %s71
      %p73 = scmp.eq.s32.totalorder %s33, 0
      %p74 = por %p72, %p73
      %s75 = ssub.s32 %s34, %s46
      %p76 = scmp.eq.s32.totalorder %s75, 0
      %s78 = sadd.s32 %s77, 1
      %s79 = scalar_select %p76, %s77, %s78
      %p82 = pneg %p76
      %p83 = scmp.eq.s32.totalorder %s27, 1
      %p84 = por %p82, %p83
      %p85 = scmp.ne.s32.totalorder %s77, %s80
      %p86 = scmp.eq.s32.totalorder %s27, 0
      %p87 = por %p85, %p86
      %p88 = scmp.ne.s32.totalorder %s77, %s80
      %p89 = scmp.eq.s32.totalorder %s32, 1
      %p90 = por %p88, %p89
      %p91 = scmp.ne.s32.totalorder %s80, %s81
      %p92 = scmp.eq.s32.totalorder %s32, 0
      %p93 = por %p91, %p92
      %p94 = scmp.ne.s32.totalorder %s80, %s81
      %p95 = scmp.eq.s32.totalorder %s33, 1
      %p96 = por %p94, %p95
      %p98 = scmp.ne.s32.totalorder %s81, %s97
      %p99 = scmp.eq.s32.totalorder %s33, 0
      %p100 = por %p98, %p99
      %s102 = sadd.s32 %s101, 1
      %p105 = scmp.eq.s32.totalorder %s27, 1
      %p106 = scmp.ne.s32.totalorder %s101, %s103
      %p107 = scmp.eq.s32.totalorder %s27, 0
      %p108 = por %p106, %p107
      %p109 = scmp.ne.s32.totalorder %s101, %s103
      %p110 = scmp.eq.s32.totalorder %s32, 1
      %p111 = por %p109, %p110
      %p112 = scmp.ne.s32.totalorder %s103, %s104
      %p113 = scmp.eq.s32.totalorder %s32, 0
      %p114 = por %p112, %p113
      %p115 = scmp.ne.s32.totalorder %s103, %s104
      %p116 = scmp.eq.s32.totalorder %s33, 1
      %p117 = por %p115, %p116
      %p119 = scmp.ne.s32.totalorder %s104, %s118
      %p120 = scmp.eq.s32.totalorder %s33, 0
      %p121 = por %p119, %p120
      %s123 = sadd.s32 %s122, 1
      %p126 = scmp.eq.s32.totalorder %s27, 1
      %p127 = scmp.ne.s32.totalorder %s122, %s124
      %p128 = scmp.eq.s32.totalorder %s27, 0
      %p129 = por %p127, %p128
      %p130 = scmp.ne.s32.totalorder %s122, %s124
      %p131 = scmp.eq.s32.totalorder %s32, 1
      %p132 = por %p130, %p131
      %p133 = scmp.ne.s32.totalorder %s124, %s125
      %p134 = scmp.eq.s32.totalorder %s32, 0
      %p135 = por %p133, %p134
      %p136 = scmp.ne.s32.totalorder %s124, %s125
      %p137 = scmp.eq.s32.totalorder %s33, 1
      %p138 = por %p136, %p137
      %p140 = scmp.ne.s32.totalorder %s125, %s139
      %p141 = scmp.eq.s32.totalorder %s33, 0
      %p142 = por %p140, %p141
      %s144 = sadd.s32 %s143, 1
      %p147 = scmp.eq.s32.totalorder %s27, 1
      %p148 = scmp.ne.s32.totalorder %s143, %s145
      %p149 = scmp.eq.s32.totalorder %s27, 0
      %p150 = por %p148, %p149
      %p151 = scmp.ne.s32.totalorder %s143, %s145
      %p152 = scmp.eq.s32.totalorder %s32, 1
      %p153 = por %p151, %p152
      %p154 = scmp.ne.s32.totalorder %s145, %s146
      %p155 = scmp.eq.s32.totalorder %s32, 0
      %p156 = por %p154, %p155
      %p157 = scmp.ne.s32.totalorder %s145, %s146
      %p158 = scmp.eq.s32.totalorder %s33, 1
      %p159 = por %p157, %p158
      %p161 = scmp.ne.s32.totalorder %s146, %s160
      %p162 = scmp.eq.s32.totalorder %s33, 0
      %p163 = por %p161, %p162
      %s165 = sadd.s32 %s164, 1
      %p168 = scmp.eq.s32.totalorder %s27, 1
      %p169 = scmp.ne.s32.totalorder %s164, %s166
      %p170 = scmp.eq.s32.totalorder %s27, 0
      %p171 = por %p169, %p170
      %p172 = scmp.ne.s32.totalorder %s164, %s166
      %p173 = scmp.eq.s32.totalorder %s32, 1
      %p174 = por %p172, %p173
      %p175 = scmp.ne.s32.totalorder %s166, %s167
      %p176 = scmp.eq.s32.totalorder %s32, 0
      %p177 = por %p175, %p176
      %p178 = scmp.ne.s32.totalorder %s166, %s167
      %p179 = scmp.eq.s32.totalorder %s33, 1
      %p180 = por %p178, %p179
      %p182 = scmp.ne.s32.totalorder %s167, %s181
      %p183 = scmp.eq.s32.totalorder %s33, 0
      %p184 = por %p182, %p183
      %s186 = sadd.s32 %s185, 1
      %p189 = scmp.eq.s32.totalorder %s27, 1
      %p190 = scmp.ne.s32.totalorder %s185, %s187
      %p191 = scmp.eq.s32.totalorder %s27, 0
      %p192 = por %p190, %p191
      %p193 = scmp.ne.s32.totalorder %s185, %s187
      %p194 = scmp.eq.s32.totalorder %s32, 1
      %p195 = por %p193, %p194
      %p196 = scmp.ne.s32.totalorder %s187, %s188
      %p197 = scmp.eq.s32.totalorder %s32, 0
      %p198 = por %p196, %p197
      %p199 = scmp.ne.s32.totalorder %s187, %s188
      %p200 = scmp.eq.s32.totalorder %s33, 1
      %p201 = por %p199, %p200
      %p203 = scmp.ne.s32.totalorder %s188, %s202
      %p204 = scmp.eq.s32.totalorder %s33, 0
      %p205 = por %p203, %p204
      %s207 = sadd.s32 %s206, 1
      %p210 = scmp.eq.s32.totalorder %s27, 1
      %p211 = scmp.ne.s32.totalorder %s206, %s208
      %p212 = scmp.eq.s32.totalorder %s27, 0
      %p213 = por %p211, %p212
      %p214 = scmp.ne.s32.totalorder %s206, %s208
      %p215 = scmp.eq.s32.totalorder %s32, 1
      %p216 = por %p214, %p215
      %p217 = scmp.ne.s32.totalorder %s208, %s209
      %p218 = scmp.eq.s32.totalorder %s32, 0
      %p219 = por %p217, %p218
      %p220 = scmp.ne.s32.totalorder %s208, %s209
      %p221 = scmp.eq.s32.totalorder %s33, 1
      %p222 = por %p220, %p221
      %p224 = scmp.ne.s32.totalorder %s209, %s223
      %p225 = scmp.eq.s32.totalorder %s33, 0
      %p226 = por %p224, %p225
      %s228 = sadd.s32 %s227, 1
      %p231 = scmp.eq.s32.totalorder %s27, 1
      %p232 = scmp.ne.s32.totalorder %s227, %s229
      %p233 = scmp.eq.s32.totalorder %s27, 0
      %p234 = por %p232, %p233
      %p235 = scmp.ne.s32.totalorder %s227, %s229
      %p236 = scmp.eq.s32.totalorder %s32, 1
      %p237 = por %p235, %p236
      %p238 = scmp.ne.s32.totalorder %s229, %s230
      %p239 = scmp.eq.s32.totalorder %s32, 0
      %p240 = por %p238, %p239
      %p241 = scmp.ne.s32.totalorder %s229, %s230
      %p242 = scmp.eq.s32.totalorder %s33, 1
      %p243 = por %p241, %p242
      %p245 = scmp.ne.s32.totalorder %s230, %s244
      %p246 = scmp.eq.s32.totalorder %s33, 0
      %p247 = por %p245, %p246
      %s249 = sadd.s32 %s248, 1
      %p252 = scmp.eq.s32.totalorder %s27, 1
      %p253 = scmp.ne.s32.totalorder %s248, %s250
      %p254 = scmp.eq.s32.totalorder %s27, 0
      %p255 = por %p253, %p254
      %p256 = scmp.ne.s32.totalorder %s248, %s250
      %p257 = scmp.eq.s32.totalorder %s32, 1
      %p258 = por %p256, %p257
      %p259 = scmp.ne.s32.totalorder %s250, %s251
      %p260 = scmp.eq.s32.totalorder %s32, 0
      %p261 = por %p259, %p260
      %p262 = scmp.ne.s32.totalorder %s250, %s251
      %p263 = scmp.eq.s32.totalorder %s33, 1
      %p264 = por %p262, %p263
      %p266 = scmp.ne.s32.totalorder %s251, %s265
      %p267 = scmp.eq.s32.totalorder %s33, 0
      %p268 = por %p266, %p267
      %s269 = ssub.s32 %s34, %s46
      %s270 = ssub.s32 %s35, %s42
      %s271 = sor.u32 %s269, %s270
      %p272 = scmp.eq.s32.totalorder %s271, 0
      %s274 = sadd.s32 %s273, 1
      %s275 = scalar_select %p272, %s273, %s274
      %p278 = pneg %p272
      %p279 = scmp.eq.s32.totalorder %s27, 1
      %p280 = por %p278, %p279
      %p281 = scmp.ne.s32.totalorder %s273, %s276
      %p282 = scmp.eq.s32.totalorder %s27, 0
      %p283 = por %p281, %p282
      %p284 = scmp.ne.s32.totalorder %s273, %s276
      %p285 = scmp.eq.s32.totalorder %s32, 1
      %p286 = por %p284, %p285
      %p287 = scmp.ne.s32.totalorder %s276, %s277
      %p288 = scmp.eq.s32.totalorder %s32, 0
      %p289 = por %p287, %p288
      %p290 = scmp.ne.s32.totalorder %s276, %s277
      %p291 = scmp.eq.s32.totalorder %s33, 1
      %p292 = por %p290, %p291
      %p294 = scmp.ne.s32.totalorder %s277, %s293
      %p295 = scmp.eq.s32.totalorder %s33, 0
      %p296 = por %p294, %p295
      %p297 = scmp.le.s32.totalorder 1, %s27
      %p298 = scmp.lt.s32.totalorder %s27, 3
      %p299 = pnand %p297, %p298
      %p300 = pneg %p299
      // Predicated region
      $region9: #{tpu_custom_call.1} parent=5 // pred_check
        _
      $region10: #{tpu_custom_call.1} parent=5 // pred_check_branch
        %302 = sbr.rel (%p299) target = $region12
      $region11: #{tpu_custom_call.1} parent=5 // pred_region
        %s303 = ssub.s32 %s27, 1
        // Predicated region
        $region13: #{tpu_custom_call.1} parent=11 // pred_check
          %p304 = pneg %p114
        $region14: #{tpu_custom_call.1} parent=11 // pred_check_branch
          %306 = sbr.rel (%p304) target = $region16
        $region15: #{tpu_custom_call.1} parent=11 // pred_region
          %308 = vsyncadd [#allocation6], 0
          %s309 = sshll.u32 %s2, 4
          %s310 = int_to_ptr.hbm [resolvable:$true] %s309
          %s311 = sshll.u32 [#allocation7], 4
          %s312 = int_to_ptr.vmem [resolvable:$true] %s311
          %317 = dma.hbm_to_vmem [thread:$0]  %s310, 512, %s312, [#allocation6], 128, 128, 8
        $region16: #{tpu_custom_call.1} parent=11 // pred_fallthru
          _
        // Predicated region
        $region17: #{tpu_custom_call.1} parent=11 // pred_check
          %p318 = pneg %p135
        $region18: #{tpu_custom_call.1} parent=11 // pred_check_branch
          %320 = sbr.rel (%p318) target = $region20
        $region19: #{tpu_custom_call.1} parent=11 // pred_region
          %322 = vsyncadd [#allocation9], 0
          %s323 = sshll.u32 %s3, 4
          %s324 = int_to_ptr.hbm [resolvable:$true] %s323
          %s325 = sshll.u32 [#allocation8], 4
          %s326 = int_to_ptr.vmem [resolvable:$true] %s325
          %331 = dma.hbm_to_vmem [thread:$0]  %s324, 512, %s326, [#allocation9], 128, 128, 8
        $region20: #{tpu_custom_call.1} parent=11 // pred_fallthru
          _
        // Predicated region
        $region21: #{tpu_custom_call.1} parent=11 // pred_check
          %p332 = pneg %p156
        $region22: #{tpu_custom_call.1} parent=11 // pred_check_branch
          %334 = sbr.rel (%p332) target = $region24
        $region23: #{tpu_custom_call.1} parent=11 // pred_region
          %336 = vsyncadd [#allocation9], 0
          %s337 = sshll.u32 %s4, 4
          %s338 = int_to_ptr.hbm [resolvable:$true] %s337
          %s339 = sshll.u32 [#allocation10], 4
          %s340 = int_to_ptr.vmem [resolvable:$true] %s339
          %345 = dma.hbm_to_vmem [thread:$0]  %s338, 512, %s340, [#allocation9], 128, 128, 8
        $region24: #{tpu_custom_call.1} parent=11 // pred_fallthru
          _
        // Predicated region
        $region25: #{tpu_custom_call.1} parent=11 // pred_check
          %p346 = pneg %p177
        $region26: #{tpu_custom_call.1} parent=11 // pred_check_branch
          %348 = sbr.rel (%p346) target = $region28
        $region27: #{tpu_custom_call.1} parent=11 // pred_region
          %350 = vsyncadd [#allocation12], 0
          %s351 = sshll.u32 %s5, 4
          %s352 = int_to_ptr.hbm [resolvable:$true] %s351
          %s353 = sshll.u32 [#allocation11], 4
          %s354 = int_to_ptr.vmem [resolvable:$true] %s353
          %359 = dma.hbm_to_vmem [thread:$0]  %s352, 512, %s354, [#allocation12], 128, 128, 8
        $region28: #{tpu_custom_call.1} parent=11 // pred_fallthru
          _
        // Predicated region
        $region29: #{tpu_custom_call.1} parent=11 // pred_check
          %p360 = pneg %p198
        $region30: #{tpu_custom_call.1} parent=11 // pred_check_branch
          %362 = sbr.rel (%p360) target = $region32
        $region31: #{tpu_custom_call.1} parent=11 // pred_region
          _
        $region32: #{tpu_custom_call.1} parent=11 // pred_fallthru
          _
        // Predicated region
        $region33: #{tpu_custom_call.1} parent=11 // pred_check
          %p363 = pneg %p219
        $region34: #{tpu_custom_call.1} parent=11 // pred_check_branch
          %365 = sbr.rel (%p363) target = $region36
        $region35: #{tpu_custom_call.1} parent=11 // pred_region
          _
        $region36: #{tpu_custom_call.1} parent=11 // pred_fallthru
          _
        // Predicated region
        $region37: #{tpu_custom_call.1} parent=11 // pred_check
          %p366 = pneg %p240
        $region38: #{tpu_custom_call.1} parent=11 // pred_check_branch
          %368 = sbr.rel (%p366) target = $region40
        $region39: #{tpu_custom_call.1} parent=11 // pred_region
          _
        $region40: #{tpu_custom_call.1} parent=11 // pred_fallthru
          _
        // Predicated region
        $region41: #{tpu_custom_call.1} parent=11 // pred_check
          %p369 = pneg %p261
        $region42: #{tpu_custom_call.1} parent=11 // pred_check_branch
          %371 = sbr.rel (%p369) target = $region44
        $region43: #{tpu_custom_call.1} parent=11 // pred_region
          _
        $region44: #{tpu_custom_call.1} parent=11 // pred_fallthru
          _
      $region12: #{tpu_custom_call.1} parent=5 // pred_fallthru
        _
      %p372 = scmp.lt.s32.totalorder %s27, 2
      // Predicated region
      $region45: #{tpu_custom_call.1} parent=5 // pred_check
        %p373 = pneg %p372
      $region46: #{tpu_custom_call.1} parent=5 // pred_check_branch
        %375 = sbr.rel (%p373) target = $region48
      $region47: #{tpu_custom_call.1} parent=5 // pred_region
        // Predicated region
        $region49: #{tpu_custom_call.1} parent=47 // pred_check
          %p376 = pneg %p61
        $region50: #{tpu_custom_call.1} parent=47 // pred_check_branch
          %378 = sbr.rel (%p376) target = $region52
        $region51: #{tpu_custom_call.1} parent=47 // pred_region
          %s379 = sand.u32 %s51, 1
          %s380 = scalar_lea.sflag [#allocation3], %s379
          %s381 = sand.u32 %s51, 1
          %s382 = smul.addr %s381, 8
          %s383 = scalar_lea.vmem [#allocation2], %s382
          %385 = vsyncadd %s380, 0
          %s386 = sadd.s32 %s35, %s34
          %s387 = smul.addr %s386, 8
          %s388 = scalar_lea.hbm %s0, %s387
          %s390 = sshll.u32 %s388, 4
          %s391 = int_to_ptr.hbm [resolvable:$true] %s390
          %s392 = sshll.u32 %s383, 4
          %s393 = int_to_ptr.vmem [resolvable:$true] %s392
          %395 = dma.hbm_to_vmem [thread:$0]  %s391, 128, %s393, %s380
        $region52: #{tpu_custom_call.1} parent=47 // pred_fallthru
          _
        // Predicated region
        $region53: #{tpu_custom_call.1} parent=47 // pred_check
          %p396 = pneg %p87
        $region54: #{tpu_custom_call.1} parent=47 // pred_check_branch
          %398 = sbr.rel (%p396) target = $region56
        $region55: #{tpu_custom_call.1} parent=47 // pred_region
          %s399 = sand.u32 %s27, 1
          %s400 = scalar_lea.sflag [#allocation6], %s399
          %s401 = sand.u32 %s77, 1
          %s402 = smul.addr %s401, 16
          %s403 = scalar_lea.vmem [#allocation5], %s402
          %405 = vsyncadd %s400, 0
          %s406 = smul.addr %s34, 2
          %s407 = smul.addr %s406, 8
          %s408 = scalar_lea.hbm %s1, %s407
          %s409 = sshll.u32 %s408, 4
          %s410 = int_to_ptr.hbm [resolvable:$true] %s409
          %s411 = sshll.u32 %s403, 4
          %s412 = int_to_ptr.vmem [resolvable:$true] %s411
          %417 = dma.hbm_to_vmem [thread:$0]  %s410, 256, %s412, %s400, 128, 128, 8
        $region56: #{tpu_custom_call.1} parent=47 // pred_fallthru
          _
      $region48: #{tpu_custom_call.1} parent=5 // pred_fallthru
        _
      %p418 = scmp.le.s32.totalorder 1, %s27
      %p419 = scmp.lt.s32.totalorder %s27, 3
      %p420 = pnand %p418, %p419
      %p421 = pneg %p420
      // Predicated region
      $region57: #{tpu_custom_call.1} parent=5 // pred_check
        _
      $region58: #{tpu_custom_call.1} parent=5 // pred_check_branch
        %423 = sbr.rel (%p420) target = $region60
      $region59: #{tpu_custom_call.1} parent=5 // pred_region
        %s424 = ssub.s32 %s27, 1
        %s425 = sand.u32 %s54, 1
        %s426 = scalar_lea.sflag [#allocation3], %s425
        %s427 = sand.u32 %s54, 1
        %s428 = smul.addr %s427, 8
        %s429 = scalar_lea.vmem [#allocation2], %s428
        // Predicated region
        $region61: #{tpu_custom_call.1} parent=59 // pred_check
          %p430 = pneg %p67
        $region62: #{tpu_custom_call.1} parent=59 // pred_check_branch
          %432 = sbr.rel (%p430) target = $region64
        $region63: #{tpu_custom_call.1} parent=59 // pred_region
          %434 = dma.done %s426, 128
        $region64: #{tpu_custom_call.1} parent=59 // pred_fallthru
          _
        %s435 = sand.u32 %s32, 1
        %s436 = scalar_lea.sflag [#allocation6], %s435
        %s437 = sand.u32 %s80, 1
        %s438 = smul.addr %s437, 16
        %s439 = scalar_lea.vmem [#allocation5], %s438
        // Predicated region
        $region65: #{tpu_custom_call.1} parent=59 // pred_check
          %p440 = pneg %p93
        $region66: #{tpu_custom_call.1} parent=59 // pred_check_branch
          %442 = sbr.rel (%p440) target = $region68
        $region67: #{tpu_custom_call.1} parent=59 // pred_region
          %444 = dma.done %s436, 256
        $region68: #{tpu_custom_call.1} parent=59 // pred_fallthru
          _
        // Predicated region
        $region69: #{tpu_custom_call.1} parent=59 // pred_check
          %p445 = pneg %p114
        $region70: #{tpu_custom_call.1} parent=59 // pred_check_branch
          %447 = sbr.rel (%p445) target = $region72
        $region71: #{tpu_custom_call.1} parent=59 // pred_region
          %449 = dma.done [#allocation6], 512
        $region72: #{tpu_custom_call.1} parent=59 // pred_fallthru
          _
        // Predicated region
        $region73: #{tpu_custom_call.1} parent=59 // pred_check
          %p450 = pneg %p135
        $region74: #{tpu_custom_call.1} parent=59 // pred_check_branch
          %452 = sbr.rel (%p450) target = $region76
        $region75: #{tpu_custom_call.1} parent=59 // pred_region
          %454 = dma.done [#allocation9], 512
        $region76: #{tpu_custom_call.1} parent=59 // pred_fallthru
          _
        // Predicated region
        $region77: #{tpu_custom_call.1} parent=59 // pred_check
          %p455 = pneg %p156
        $region78: #{tpu_custom_call.1} parent=59 // pred_check_branch
          %457 = sbr.rel (%p455) target = $region80
        $region79: #{tpu_custom_call.1} parent=59 // pred_region
          %459 = dma.done [#allocation9], 512
        $region80: #{tpu_custom_call.1} parent=59 // pred_fallthru
          _
        // Predicated region
        $region81: #{tpu_custom_call.1} parent=59 // pred_check
          %p460 = pneg %p177
        $region82: #{tpu_custom_call.1} parent=59 // pred_check_branch
          %462 = sbr.rel (%p460) target = $region84
        $region83: #{tpu_custom_call.1} parent=59 // pred_region
          %464 = dma.done [#allocation12], 512
        $region84: #{tpu_custom_call.1} parent=59 // pred_fallthru
          _
        %s465 = sand.u32 %s54, 1
        %s466 = scalar_lea.sflag [#allocation3], %s465
        %s467 = sand.u32 %s54, 1
        %s468 = smul.addr %s467, 8
        %s469 = scalar_lea.vmem [#allocation2], %s468
        %p470 = pneg %p67
        %p471 = pneg %p64
        %s472 = sand.u32 %s32, 1
        %s473 = scalar_lea.sflag [#allocation6], %s472
        %s474 = sand.u32 %s80, 1
        %s475 = smul.addr %s474, 16
        %s476 = scalar_lea.vmem [#allocation5], %s475
        %p477 = pneg %p93
        %p478 = pneg %p90
        %p479 = pneg %p114
        %p480 = pneg %p111
        %p481 = pneg %p135
        %p482 = pneg %p132
        %p483 = pneg %p156
        %p484 = pneg %p153
        %p485 = pneg %p177
        %p486 = pneg %p174
        %p487 = pneg %p198
        %p488 = pneg %p195
        %p489 = pneg %p219
        %p490 = pneg %p216
        %p491 = pneg %p240
        %p492 = pneg %p237
        %p493 = pneg %p261
        %p494 = pneg %p258
        %p495 = pneg %p289
        %p496 = pneg %p286
        %s497 = sand.u32 %s276, 1
        %s498 = scalar_lea.sflag [#allocation4], %s497
        %s499 = sand.u32 %s276, 1
        %s500 = smul.addr %s499, 8
        %s501 = scalar_lea.vmem [#allocation13], %s500
        %v502 = vld [vmem:[%s429] sm:$0xff]
        %v503 = vld [vmem:[%s439] sm:$0xff]
        %v504 = vld [vmem:[%s439 + $0x8] sm:$0xff]
        %v505 = vld [vmem:[#allocation7] sm:$0xff]
        %v506 = vld [vmem:[#allocation7 + $0x8] sm:$0xff]
        %v507 = vld [vmem:[#allocation7 + $0x10] sm:$0xff]
        %v508 = vld [vmem:[#allocation7 + $0x18] sm:$0xff]
        %v509 = vld [vmem:[%s6] sm:$0x1]
        %v511 = vperm.slane %v509, 0
        %vm513 = vcmask 261120
        %v515 = vsel %vm513, %v502, 0
        %517 = vmatpush.msra.mxu0 0.0
        %518 = vmatpush.msra.mxu0 0.0
        %519 = vmatpush.msra.mxu0 0.0
        %520 = vmatpush.msra.mxu0 0.0
        %521 = vmatpush.msra.mxu0 0.0
        %522 = vmatpush.msra.mxu0 0.0
        %523 = vmatpush.msra.mxu0 0.0
        %524 = vmatpush.msra.mxu0 0.0
        %525 = vmatpush.msra.mxu0 0.0
        %526 = vmatpush.msra.mxu0 0.0
        %527 = vmatpush.msra.mxu0 0.0
        %528 = vmatpush.msra.mxu0 0.0
        %529 = vmatpush.msra.mxu0 %v508
        %530 = vmatpush.msra.mxu0 %v507
        %531 = vmatpush.msra.mxu0 %v506
        %532 = vmatpush.msra.mxu0 %v505
        %533 = vmatmul.f32.gmra.mxu0 %v515
        %v534 = vpop.f32.mrf.mxu0
        %v535 = vadd.f32 %v511, %v534
        %536 = vdwg.mxu0
        %v537 = vmul.f32 %v535, 0.35355338
        %v538 = vld [vmem:[#allocation8] sm:$0xff]
        %v539 = vld [vmem:[#allocation8 + $0x8] sm:$0xff]
        %v540 = vld [vmem:[#allocation8 + $0x10] sm:$0xff]
        %v541 = vld [vmem:[#allocation8 + $0x18] sm:$0xff]
        %v542 = vld [vmem:[%s7] sm:$0x1]
        %v544 = vperm.slane %v542, 0
        %v547 = vsel %vm513, %v503, 0
        %v550 = vsel %vm513, %v504, 0
        %552 = vmatpush.msra.mxu0 0.0
        %553 = vmatpush.msra.mxu0 0.0
        %554 = vmatpush.msra.mxu0 0.0
        %555 = vmatpush.msra.mxu0 0.0
        %556 = vmatpush.msra.mxu0 0.0
        %557 = vmatpush.msra.mxu0 0.0
        %558 = vmatpush.msra.mxu0 0.0
        %559 = vmatpush.msra.mxu0 0.0
        %560 = vmatpush.msra.mxu0 0.0
        %561 = vmatpush.msra.mxu0 0.0
        %562 = vmatpush.msra.mxu0 0.0
        %563 = vmatpush.msra.mxu0 0.0
        %564 = vmatpush.msra.mxu0 %v541
        %565 = vmatpush.msra.mxu0 %v540
        %566 = vmatpush.msra.mxu0 %v539
        %567 = vmatpush.msra.mxu0 %v538
        %568 = vmatmul.f32.gmra.mxu0 %v547
        %v569 = vpop.f32.mrf.mxu0
        %v570 = vadd.f32 %v544, %v569
        %571 = vmatmul.f32.gmra.mxu0 %v550
        %v572 = vpop.f32.mrf.mxu0
        %v573 = vadd.f32 %v544, %v572
        %574 = vdwg.mxu0
        %v575 = vld [vmem:[#allocation10] sm:$0xff]
        %v576 = vld [vmem:[#allocation10 + $0x8] sm:$0xff]
        %v577 = vld [vmem:[#allocation10 + $0x10] sm:$0xff]
        %v578 = vld [vmem:[#allocation10 + $0x18] sm:$0xff]
        %v579 = vld [vmem:[%s8] sm:$0x1]
        %v581 = vperm.slane %v579, 0
        %583 = vmatpush.msra.mxu0 0.0
        %584 = vmatpush.msra.mxu0 0.0
        %585 = vmatpush.msra.mxu0 0.0
        %586 = vmatpush.msra.mxu0 0.0
        %587 = vmatpush.msra.mxu0 0.0
        %588 = vmatpush.msra.mxu0 0.0
        %589 = vmatpush.msra.mxu0 0.0
        %590 = vmatpush.msra.mxu0 0.0
        %591 = vmatpush.msra.mxu0 0.0
        %592 = vmatpush.msra.mxu0 0.0
        %593 = vmatpush.msra.mxu0 0.0
        %594 = vmatpush.msra.mxu0 0.0
        %595 = vmatpush.msra.mxu0 %v578
        %596 = vmatpush.msra.mxu0 %v577
        %597 = vmatpush.msra.mxu0 %v576
        %598 = vmatpush.msra.mxu0 %v575
        %599 = vmatmul.f32.gmra.mxu0 %v547
        %v600 = vpop.f32.mrf.mxu0
        %v601 = vadd.f32 %v581, %v600
        %602 = vmatmul.f32.gmra.mxu0 %v550
        %v603 = vpop.f32.mrf.mxu0
        %v604 = vadd.f32 %v581, %v603
        %605 = vdwg.mxu0
        %vm606 = vcmask 64512
        %v608 = vsel %vm606, %v537, 0
        %v611 = vsel %vm606, %v570, 0
        %v614 = vsel %vm606, %v573, 0
        %616 = vmatpush.xpose.msra.mxu0 0.0
        %617 = vmatpush.xpose.msra.mxu0 0.0
        %618 = vmatpush.xpose.msra.mxu0 0.0
        %619 = vmatpush.xpose.msra.mxu0 0.0
        %620 = vmatpush.xpose.msra.mxu0 0.0
        %621 = vmatpush.xpose.msra.mxu0 0.0
        %622 = vmatpush.xpose.msra.mxu0 0.0
        %623 = vmatpush.xpose.msra.mxu0 0.0
        %624 = vmatpush.xpose.msra.mxu0 0.0
        %625 = vmatpush.xpose.msra.mxu0 0.0
        %626 = vmatpush.xpose.msra.mxu0 0.0
        %627 = vmatpush.xpose.msra.mxu0 0.0
        %628 = vmatpush.xpose.msra.mxu0 0.0
        %629 = vmatpush.xpose.msra.mxu0 0.0
        %630 = vmatpush.xpose.msra.mxu0 %v614
        %631 = vmatpush.xpose.msra.mxu0 %v611
        %632 = vmatmul.f32.gmra.mxu0 %v608
        %v633 = vpop.f32.mrf.mxu0
        %v634 = vadd.f32 0.0, %v633
        %635 = vdwg.mxu0
        %vm636 = vcmask 130048
        %v637 = vsel %vm636, %v634, -inf
        %638 = vmax.xlane.f32.xlu0 %v637
        %v639 = vpop.xlane.xlu0 %638
        %v640 = vsub.f32 %v634, %v639
        %v641 = vmul.f32 %v640, 1.442695
        %v642 = vpow.pop %v641
        %v643 = vsel %vm636, %v642, 0.0
        %644 = vadd.xlane.f32.xlu0 %v643
        %v645 = vpop.xlane.xlu0 %644
        %v646 = vrcp.pop %v645
        %v647 = vmul.f32 %v642, %v646
        %v649 = vsel %vm636, %v647, 0
        %651 = vmatpush.msra.mxu0 0.0
        %652 = vmatpush.msra.mxu0 0.0
        %653 = vmatpush.msra.mxu0 0.0
        %654 = vmatpush.msra.mxu0 0.0
        %655 = vmatpush.msra.mxu0 0.0
        %656 = vmatpush.msra.mxu0 0.0
        %657 = vmatpush.msra.mxu0 0.0
        %658 = vmatpush.msra.mxu0 0.0
        %659 = vmatpush.msra.mxu0 0.0
        %660 = vmatpush.msra.mxu0 0.0
        %661 = vmatpush.msra.mxu0 0.0
        %662 = vmatpush.msra.mxu0 0.0
        %663 = vmatpush.msra.mxu0 0.0
        %664 = vmatpush.msra.mxu0 0.0
        %665 = vmatpush.msra.mxu0 %v604
        %666 = vmatpush.msra.mxu0 %v601
        %667 = vmatmul.f32.gmra.mxu0 %v649
        %v668 = vpop.f32.mrf.mxu0
        %v669 = vadd.f32 0.0, %v668
        %670 = vdwg.mxu0
        %v671 = vld [vmem:[#allocation11] sm:$0xff]
        %676 = vrot.lane.b32.xlu0 %v505, 120
        %v677 = vpop.permute.xlu0 %676
        %678 = vrot.lane.b32.xlu0 %v506, 120
        %v679 = vpop.permute.xlu0 %678
        %680 = vrot.lane.b32.xlu0 %v507, 120
        %v681 = vpop.permute.xlu0 %680
        %682 = vrot.lane.b32.xlu0 %v508, 120
        %v683 = vpop.permute.xlu0 %682
        %688 = vrot.lane.b32.xlu0 %v511, 120
        %v689 = vpop.permute.xlu0 %688
        %691 = vmatpush.msra.mxu0 0.0
        %692 = vmatpush.msra.mxu0 0.0
        %693 = vmatpush.msra.mxu0 0.0
        %694 = vmatpush.msra.mxu0 0.0
        %695 = vmatpush.msra.mxu0 0.0
        %696 = vmatpush.msra.mxu0 0.0
        %697 = vmatpush.msra.mxu0 0.0
        %698 = vmatpush.msra.mxu0 0.0
        %699 = vmatpush.msra.mxu0 0.0
        %700 = vmatpush.msra.mxu0 0.0
        %701 = vmatpush.msra.mxu0 0.0
        %702 = vmatpush.msra.mxu0 0.0
        %703 = vmatpush.msra.mxu0 %v683
        %704 = vmatpush.msra.mxu0 %v681
        %705 = vmatpush.msra.mxu0 %v679
        %706 = vmatpush.msra.mxu0 %v677
        %707 = vmatmul.f32.gmra.mxu0 %v515
        %v708 = vpop.f32.mrf.mxu0
        %v709 = vadd.f32 %v689, %v708
        %710 = vdwg.mxu0
        %v711 = vmul.f32 %v709, 0.35355338
        %716 = vrot.lane.b32.xlu0 %v538, 120
        %v717 = vpop.permute.xlu0 %716
        %718 = vrot.lane.b32.xlu0 %v539, 120
        %v719 = vpop.permute.xlu0 %718
        %720 = vrot.lane.b32.xlu0 %v540, 120
        %v721 = vpop.permute.xlu0 %720
        %722 = vrot.lane.b32.xlu0 %v541, 120
        %v723 = vpop.permute.xlu0 %722
        %728 = vrot.lane.b32.xlu0 %v544, 120
        %v729 = vpop.permute.xlu0 %728
        %731 = vmatpush.msra.mxu0 0.0
        %732 = vmatpush.msra.mxu0 0.0
        %733 = vmatpush.msra.mxu0 0.0
        %734 = vmatpush.msra.mxu0 0.0
        %735 = vmatpush.msra.mxu0 0.0
        %736 = vmatpush.msra.mxu0 0.0
        %737 = vmatpush.msra.mxu0 0.0
        %738 = vmatpush.msra.mxu0 0.0
        %739 = vmatpush.msra.mxu0 0.0
        %740 = vmatpush.msra.mxu0 0.0
        %741 = vmatpush.msra.mxu0 0.0
        %742 = vmatpush.msra.mxu0 0.0
        %743 = vmatpush.msra.mxu0 %v723
        %744 = vmatpush.msra.mxu0 %v721
        %745 = vmatpush.msra.mxu0 %v719
        %746 = vmatpush.msra.mxu0 %v717
        %747 = vmatmul.f32.gmra.mxu0 %v547
        %v748 = vpop.f32.mrf.mxu0
        %v749 = vadd.f32 %v729, %v748
        %750 = vmatmul.f32.gmra.mxu0 %v550
        %v751 = vpop.f32.mrf.mxu0
        %v752 = vadd.f32 %v729, %v751
        %753 = vdwg.mxu0
        %758 = vrot.lane.b32.xlu0 %v575, 120
        %v759 = vpop.permute.xlu0 %758
        %760 = vrot.lane.b32.xlu0 %v576, 120
        %v761 = vpop.permute.xlu0 %760
        %762 = vrot.lane.b32.xlu0 %v577, 120
        %v763 = vpop.permute.xlu0 %762
        %764 = vrot.lane.b32.xlu0 %v578, 120
        %v765 = vpop.permute.xlu0 %764
        %770 = vrot.lane.b32.xlu0 %v581, 120
        %v771 = vpop.permute.xlu0 %770
        %773 = vmatpush.msra.mxu0 0.0
        %774 = vmatpush.msra.mxu0 0.0
        %775 = vmatpush.msra.mxu0 0.0
        %776 = vmatpush.msra.mxu0 0.0
        %777 = vmatpush.msra.mxu0 0.0
        %778 = vmatpush.msra.mxu0 0.0
        %779 = vmatpush.msra.mxu0 0.0
        %780 = vmatpush.msra.mxu0 0.0
        %781 = vmatpush.msra.mxu0 0.0
        %782 = vmatpush.msra.mxu0 0.0
        %783 = vmatpush.msra.mxu0 0.0
        %784 = vmatpush.msra.mxu0 0.0
        %785 = vmatpush.msra.mxu0 %v765
        %786 = vmatpush.msra.mxu0 %v763
        %787 = vmatpush.msra.mxu0 %v761
        %788 = vmatpush.msra.mxu0 %v759
        %789 = vmatmul.f32.gmra.mxu0 %v547
        %v790 = vpop.f32.mrf.mxu0
        %v791 = vadd.f32 %v771, %v790
        %792 = vmatmul.f32.gmra.mxu0 %v550
        %v793 = vpop.f32.mrf.mxu0
        %v794 = vadd.f32 %v771, %v793
        %795 = vdwg.mxu0
        %v797 = vsel %vm606, %v711, 0
        %v800 = vsel %vm606, %v749, 0
        %v803 = vsel %vm606, %v752, 0
        %805 = vmatpush.xpose.msra.mxu0 0.0
        %806 = vmatpush.xpose.msra.mxu0 0.0
        %807 = vmatpush.xpose.msra.mxu0 0.0
        %808 = vmatpush.xpose.msra.mxu0 0.0
        %809 = vmatpush.xpose.msra.mxu0 0.0
        %810 = vmatpush.xpose.msra.mxu0 0.0
        %811 = vmatpush.xpose.msra.mxu0 0.0
        %812 = vmatpush.xpose.msra.mxu0 0.0
        %813 = vmatpush.xpose.msra.mxu0 0.0
        %814 = vmatpush.xpose.msra.mxu0 0.0
        %815 = vmatpush.xpose.msra.mxu0 0.0
        %816 = vmatpush.xpose.msra.mxu0 0.0
        %817 = vmatpush.xpose.msra.mxu0 0.0
        %818 = vmatpush.xpose.msra.mxu0 0.0
        %819 = vmatpush.xpose.msra.mxu0 %v803
        %820 = vmatpush.xpose.msra.mxu0 %v800
        %821 = vmatmul.f32.gmra.mxu0 %v797
        %v822 = vpop.f32.mrf.mxu0
        %v823 = vadd.f32 0.0, %v822
        %824 = vdwg.mxu0
        %v825 = vsel %vm636, %v823, -inf
        %826 = vmax.xlane.f32.xlu0 %v825
        %v827 = vpop.xlane.xlu0 %826
        %v828 = vsub.f32 %v823, %v827
        %v829 = vmul.f32 %v828, 1.442695
        %v830 = vpow.pop %v829
        %v831 = vsel %vm636, %v830, 0.0
        %832 = vadd.xlane.f32.xlu0 %v831
        %v833 = vpop.xlane.xlu0 %832
        %v834 = vrcp.pop %v833
        %v835 = vmul.f32 %v830, %v834
        %v837 = vsel %vm636, %v835, 0
        %839 = vmatpush.msra.mxu0 0.0
        %840 = vmatpush.msra.mxu0 0.0
        %841 = vmatpush.msra.mxu0 0.0
        %842 = vmatpush.msra.mxu0 0.0
        %843 = vmatpush.msra.mxu0 0.0
        %844 = vmatpush.msra.mxu0 0.0
        %845 = vmatpush.msra.mxu0 0.0
        %846 = vmatpush.msra.mxu0 0.0
        %847 = vmatpush.msra.mxu0 0.0
        %848 = vmatpush.msra.mxu0 0.0
        %849 = vmatpush.msra.mxu0 0.0
        %850 = vmatpush.msra.mxu0 0.0
        %851 = vmatpush.msra.mxu0 0.0
        %852 = vmatpush.msra.mxu0 0.0
        %853 = vmatpush.msra.mxu0 %v794
        %854 = vmatpush.msra.mxu0 %v791
        %855 = vmatmul.f32.gmra.mxu0 %v837
        %v856 = vpop.f32.mrf.mxu0
        %v857 = vadd.f32 0.0, %v856
        %858 = vdwg.mxu0
        %v859 = vld [vmem:[#allocation11 + $0x8] sm:$0xff]
        %v861 = vsel %vm606, %v857, 0
        %863 = vmatpush.msra.mxu0 0.0
        %864 = vmatpush.msra.mxu0 0.0
        %865 = vmatpush.msra.mxu0 0.0
        %866 = vmatpush.msra.mxu0 0.0
        %867 = vmatpush.msra.mxu0 0.0
        %868 = vmatpush.msra.mxu0 0.0
        %869 = vmatpush.msra.mxu0 0.0
        %870 = vmatpush.msra.mxu0 0.0
        %871 = vmatpush.msra.mxu0 0.0
        %872 = vmatpush.msra.mxu0 0.0
        %873 = vmatpush.msra.mxu0 0.0
        %874 = vmatpush.msra.mxu0 0.0
        %875 = vmatpush.msra.mxu0 0.0
        %876 = vmatpush.msra.mxu0 0.0
        %877 = vmatpush.msra.mxu0 0.0
        %878 = vmatpush.msra.mxu0 %v859
        %879 = vmatmul.f32.gmra.mxu0 %v861
        %v880 = vpop.f32.mrf.mxu0
        %v881 = vadd.f32 0.0, %v880
        %882 = vdwg.mxu0
        %v884 = vsel %vm606, %v669, 0
        %886 = vmatpush.msra.mxu0 0.0
        %887 = vmatpush.msra.mxu0 0.0
        %888 = vmatpush.msra.mxu0 0.0
        %889 = vmatpush.msra.mxu0 0.0
        %890 = vmatpush.msra.mxu0 0.0
        %891 = vmatpush.msra.mxu0 0.0
        %892 = vmatpush.msra.mxu0 0.0
        %893 = vmatpush.msra.mxu0 0.0
        %894 = vmatpush.msra.mxu0 0.0
        %895 = vmatpush.msra.mxu0 0.0
        %896 = vmatpush.msra.mxu0 0.0
        %897 = vmatpush.msra.mxu0 0.0
        %898 = vmatpush.msra.mxu0 0.0
        %899 = vmatpush.msra.mxu0 0.0
        %900 = vmatpush.msra.mxu0 0.0
        %901 = vmatpush.msra.mxu0 %v671
        %902 = vmatmul.f32.gmra.mxu0 %v884
        %v903 = vpop.f32.mrf.mxu0
        %v904 = vadd.f32 %v881, %v903
        %905 = vdwg.mxu0
        %906 = vrot.lane.b32.xlu0 %v505, 112
        %v907 = vpop.permute.xlu0 %906
        %908 = vrot.lane.b32.xlu0 %v506, 112
        %v909 = vpop.permute.xlu0 %908
        %910 = vrot.lane.b32.xlu0 %v507, 112
        %v911 = vpop.permute.xlu0 %910
        %912 = vrot.lane.b32.xlu0 %v508, 112
        %v913 = vpop.permute.xlu0 %912
        %918 = vrot.lane.b32.xlu0 %v511, 112
        %v919 = vpop.permute.xlu0 %918
        %921 = vmatpush.msra.mxu0 0.0
        %922 = vmatpush.msra.mxu0 0.0
        %923 = vmatpush.msra.mxu0 0.0
        %924 = vmatpush.msra.mxu0 0.0
        %925 = vmatpush.msra.mxu0 0.0
        %926 = vmatpush.msra.mxu0 0.0
        %927 = vmatpush.msra.mxu0 0.0
        %928 = vmatpush.msra.mxu0 0.0
        %929 = vmatpush.msra.mxu0 0.0
        %930 = vmatpush.msra.mxu0 0.0
        %931 = vmatpush.msra.mxu0 0.0
        %932 = vmatpush.msra.mxu0 0.0
        %933 = vmatpush.msra.mxu0 %v913
        %934 = vmatpush.msra.mxu0 %v911
        %935 = vmatpush.msra.mxu0 %v909
        %936 = vmatpush.msra.mxu0 %v907
        %937 = vmatmul.f32.gmra.mxu0 %v515
        %v938 = vpop.f32.mrf.mxu0
        %v939 = vadd.f32 %v919, %v938
        %940 = vdwg.mxu0
        %v941 = vmul.f32 %v939, 0.35355338
        %942 = vrot.lane.b32.xlu0 %v538, 112
        %v943 = vpop.permute.xlu0 %942
        %944 = vrot.lane.b32.xlu0 %v539, 112
        %v945 = vpop.permute.xlu0 %944
        %946 = vrot.lane.b32.xlu0 %v540, 112
        %v947 = vpop.permute.xlu0 %946
        %948 = vrot.lane.b32.xlu0 %v541, 112
        %v949 = vpop.permute.xlu0 %948
        %954 = vrot.lane.b32.xlu0 %v544, 112
        %v955 = vpop.permute.xlu0 %954
        %957 = vmatpush.msra.mxu0 0.0
        %958 = vmatpush.msra.mxu0 0.0
        %959 = vmatpush.msra.mxu0 0.0
        %960 = vmatpush.msra.mxu0 0.0
        %961 = vmatpush.msra.mxu0 0.0
        %962 = vmatpush.msra.mxu0 0.0
        %963 = vmatpush.msra.mxu0 0.0
        %964 = vmatpush.msra.mxu0 0.0
        %965 = vmatpush.msra.mxu0 0.0
        %966 = vmatpush.msra.mxu0 0.0
        %967 = vmatpush.msra.mxu0 0.0
        %968 = vmatpush.msra.mxu0 0.0
        %969 = vmatpush.msra.mxu0 %v949
        %970 = vmatpush.msra.mxu0 %v947
        %971 = vmatpush.msra.mxu0 %v945
        %972 = vmatpush.msra.mxu0 %v943
        %973 = vmatmul.f32.gmra.mxu0 %v547
        %v974 = vpop.f32.mrf.mxu0
        %v975 = vadd.f32 %v955, %v974
        %976 = vmatmul.f32.gmra.mxu0 %v550
        %v977 = vpop.f32.mrf.mxu0
        %v978 = vadd.f32 %v955, %v977
        %979 = vdwg.mxu0
        %980 = vrot.lane.b32.xlu0 %v575, 112
        %v981 = vpop.permute.xlu0 %980
        %982 = vrot.lane.b32.xlu0 %v576, 112
        %v983 = vpop.permute.xlu0 %982
        %984 = vrot.lane.b32.xlu0 %v577, 112
        %v985 = vpop.permute.xlu0 %984
        %986 = vrot.lane.b32.xlu0 %v578, 112
        %v987 = vpop.permute.xlu0 %986
        %992 = vrot.lane.b32.xlu0 %v581, 112
        %v993 = vpop.permute.xlu0 %992
        %995 = vmatpush.msra.mxu0 0.0
        %996 = vmatpush.msra.mxu0 0.0
        %997 = vmatpush.msra.mxu0 0.0
        %998 = vmatpush.msra.mxu0 0.0
        %999 = vmatpush.msra.mxu0 0.0
        %1000 = vmatpush.msra.mxu0 0.0
        %1001 = vmatpush.msra.mxu0 0.0
        %1002 = vmatpush.msra.mxu0 0.0
        %1003 = vmatpush.msra.mxu0 0.0
        %1004 = vmatpush.msra.mxu0 0.0
        %1005 = vmatpush.msra.mxu0 0.0
        %1006 = vmatpush.msra.mxu0 0.0
        %1007 = vmatpush.msra.mxu0 %v987
        %1008 = vmatpush.msra.mxu0 %v985
        %1009 = vmatpush.msra.mxu0 %v983
        %1010 = vmatpush.msra.mxu0 %v981
        %1011 = vmatmul.f32.gmra.mxu0 %v547
        %v1012 = vpop.f32.mrf.mxu0
        %v1013 = vadd.f32 %v993, %v1012
        %1014 = vmatmul.f32.gmra.mxu0 %v550
        %v1015 = vpop.f32.mrf.mxu0
        %v1016 = vadd.f32 %v993, %v1015
        %1017 = vdwg.mxu0
        %v1019 = vsel %vm606, %v941, 0
        %v1022 = vsel %vm606, %v975, 0
        %v1025 = vsel %vm606, %v978, 0
        %1027 = vmatpush.xpose.msra.mxu0 0.0
        %1028 = vmatpush.xpose.msra.mxu0 0.0
        %1029 = vmatpush.xpose.msra.mxu0 0.0
        %1030 = vmatpush.xpose.msra.mxu0 0.0
        %1031 = vmatpush.xpose.msra.mxu0 0.0
        %1032 = vmatpush.xpose.msra.mxu0 0.0
        %1033 = vmatpush.xpose.msra.mxu0 0.0
        %1034 = vmatpush.xpose.msra.mxu0 0.0
        %1035 = vmatpush.xpose.msra.mxu0 0.0
        %1036 = vmatpush.xpose.msra.mxu0 0.0
        %1037 = vmatpush.xpose.msra.mxu0 0.0
        %1038 = vmatpush.xpose.msra.mxu0 0.0
        %1039 = vmatpush.xpose.msra.mxu0 0.0
        %1040 = vmatpush.xpose.msra.mxu0 0.0
        %1041 = vmatpush.xpose.msra.mxu0 %v1025
        %1042 = vmatpush.xpose.msra.mxu0 %v1022
        %1043 = vmatmul.f32.gmra.mxu0 %v1019
        %v1044 = vpop.f32.mrf.mxu0
        %v1045 = vadd.f32 0.0, %v1044
        %1046 = vdwg.mxu0
        %v1047 = vsel %vm636, %v1045, -inf
        %1048 = vmax.xlane.f32.xlu0 %v1047
        %v1049 = vpop.xlane.xlu0 %1048
        %v1050 = vsub.f32 %v1045, %v1049
        %v1051 = vmul.f32 %v1050, 1.442695
        %v1052 = vpow.pop %v1051
        %v1053 = vsel %vm636, %v1052, 0.0
        %1054 = vadd.xlane.f32.xlu0 %v1053
        %v1055 = vpop.xlane.xlu0 %1054
        %v1056 = vrcp.pop %v1055
        %v1057 = vmul.f32 %v1052, %v1056
        %v1059 = vsel %vm636, %v1057, 0
        %1061 = vmatpush.msra.mxu0 0.0
        %1062 = vmatpush.msra.mxu0 0.0
        %1063 = vmatpush.msra.mxu0 0.0
        %1064 = vmatpush.msra.mxu0 0.0
        %1065 = vmatpush.msra.mxu0 0.0
        %1066 = vmatpush.msra.mxu0 0.0
        %1067 = vmatpush.msra.mxu0 0.0
        %1068 = vmatpush.msra.mxu0 0.0
        %1069 = vmatpush.msra.mxu0 0.0
        %1070 = vmatpush.msra.mxu0 0.0
        %1071 = vmatpush.msra.mxu0 0.0
        %1072 = vmatpush.msra.mxu0 0.0
        %1073 = vmatpush.msra.mxu0 0.0
        %1074 = vmatpush.msra.mxu0 0.0
        %1075 = vmatpush.msra.mxu0 %v1016
        %1076 = vmatpush.msra.mxu0 %v1013
        %1077 = vmatmul.f32.gmra.mxu0 %v1059
        %v1078 = vpop.f32.mrf.mxu0
        %v1079 = vadd.f32 0.0, %v1078
        %1080 = vdwg.mxu0
        %v1081 = vld [vmem:[#allocation11 + $0x10] sm:$0xff]
        %v1083 = vsel %vm606, %v1079, 0
        %1085 = vmatpush.msra.mxu0 0.0
        %1086 = vmatpush.msra.mxu0 0.0
        %1087 = vmatpush.msra.mxu0 0.0
        %1088 = vmatpush.msra.mxu0 0.0
        %1089 = vmatpush.msra.mxu0 0.0
        %1090 = vmatpush.msra.mxu0 0.0
        %1091 = vmatpush.msra.mxu0 0.0
        %1092 = vmatpush.msra.mxu0 0.0
        %1093 = vmatpush.msra.mxu0 0.0
        %1094 = vmatpush.msra.mxu0 0.0
        %1095 = vmatpush.msra.mxu0 0.0
        %1096 = vmatpush.msra.mxu0 0.0
        %1097 = vmatpush.msra.mxu0 0.0
        %1098 = vmatpush.msra.mxu0 0.0
        %1099 = vmatpush.msra.mxu0 0.0
        %1100 = vmatpush.msra.mxu0 %v1081
        %1101 = vmatmul.f32.gmra.mxu0 %v1083
        %v1102 = vpop.f32.mrf.mxu0
        %v1103 = vadd.f32 0.0, %v1102
        %1104 = vdwg.mxu0
        %v1105 = vadd.f32 %v904, %v1103
        %1106 = vrot.lane.b32.xlu0 %v505, 104
        %v1107 = vpop.permute.xlu0 %1106
        %1108 = vrot.lane.b32.xlu0 %v506, 104
        %v1109 = vpop.permute.xlu0 %1108
        %1110 = vrot.lane.b32.xlu0 %v507, 104
        %v1111 = vpop.permute.xlu0 %1110
        %1112 = vrot.lane.b32.xlu0 %v508, 104
        %v1113 = vpop.permute.xlu0 %1112
        %1118 = vrot.lane.b32.xlu0 %v511, 104
        %v1119 = vpop.permute.xlu0 %1118
        %1121 = vmatpush.msra.mxu0 0.0
        %1122 = vmatpush.msra.mxu0 0.0
        %1123 = vmatpush.msra.mxu0 0.0
        %1124 = vmatpush.msra.mxu0 0.0
        %1125 = vmatpush.msra.mxu0 0.0
        %1126 = vmatpush.msra.mxu0 0.0
        %1127 = vmatpush.msra.mxu0 0.0
        %1128 = vmatpush.msra.mxu0 0.0
        %1129 = vmatpush.msra.mxu0 0.0
        %1130 = vmatpush.msra.mxu0 0.0
        %1131 = vmatpush.msra.mxu0 0.0
        %1132 = vmatpush.msra.mxu0 0.0
        %1133 = vmatpush.msra.mxu0 %v1113
        %1134 = vmatpush.msra.mxu0 %v1111
        %1135 = vmatpush.msra.mxu0 %v1109
        %1136 = vmatpush.msra.mxu0 %v1107
        %1137 = vmatmul.f32.gmra.mxu0 %v515
        %v1138 = vpop.f32.mrf.mxu0
        %v1139 = vadd.f32 %v1119, %v1138
        %1140 = vdwg.mxu0
        %v1141 = vmul.f32 %v1139, 0.35355338
        %1142 = vrot.lane.b32.xlu0 %v538, 104
        %v1143 = vpop.permute.xlu0 %1142
        %1144 = vrot.lane.b32.xlu0 %v539, 104
        %v1145 = vpop.permute.xlu0 %1144
        %1146 = vrot.lane.b32.xlu0 %v540, 104
        %v1147 = vpop.permute.xlu0 %1146
        %1148 = vrot.lane.b32.xlu0 %v541, 104
        %v1149 = vpop.permute.xlu0 %1148
        %1154 = vrot.lane.b32.xlu0 %v544, 104
        %v1155 = vpop.permute.xlu0 %1154
        %1157 = vmatpush.msra.mxu0 0.0
        %1158 = vmatpush.msra.mxu0 0.0
        %1159 = vmatpush.msra.mxu0 0.0
        %1160 = vmatpush.msra.mxu0 0.0
        %1161 = vmatpush.msra.mxu0 0.0
        %1162 = vmatpush.msra.mxu0 0.0
        %1163 = vmatpush.msra.mxu0 0.0
        %1164 = vmatpush.msra.mxu0 0.0
        %1165 = vmatpush.msra.mxu0 0.0
        %1166 = vmatpush.msra.mxu0 0.0
        %1167 = vmatpush.msra.mxu0 0.0
        %1168 = vmatpush.msra.mxu0 0.0
        %1169 = vmatpush.msra.mxu0 %v1149
        %1170 = vmatpush.msra.mxu0 %v1147
        %1171 = vmatpush.msra.mxu0 %v1145
        %1172 = vmatpush.msra.mxu0 %v1143
        %1173 = vmatmul.f32.gmra.mxu0 %v547
        %v1174 = vpop.f32.mrf.mxu0
        %v1175 = vadd.f32 %v1155, %v1174
        %1176 = vmatmul.f32.gmra.mxu0 %v550
        %v1177 = vpop.f32.mrf.mxu0
        %v1178 = vadd.f32 %v1155, %v1177
        %1179 = vdwg.mxu0
        %1180 = vrot.lane.b32.xlu0 %v575, 104
        %v1181 = vpop.permute.xlu0 %1180
        %1182 = vrot.lane.b32.xlu0 %v576, 104
        %v1183 = vpop.permute.xlu0 %1182
        %1184 = vrot.lane.b32.xlu0 %v577, 104
        %v1185 = vpop.permute.xlu0 %1184
        %1186 = vrot.lane.b32.xlu0 %v578, 104
        %v1187 = vpop.permute.xlu0 %1186
        %1192 = vrot.lane.b32.xlu0 %v581, 104
        %v1193 = vpop.permute.xlu0 %1192
        %1195 = vmatpush.msra.mxu0 0.0
        %1196 = vmatpush.msra.mxu0 0.0
        %1197 = vmatpush.msra.mxu0 0.0
        %1198 = vmatpush.msra.mxu0 0.0
        %1199 = vmatpush.msra.mxu0 0.0
        %1200 = vmatpush.msra.mxu0 0.0
        %1201 = vmatpush.msra.mxu0 0.0
        %1202 = vmatpush.msra.mxu0 0.0
        %1203 = vmatpush.msra.mxu0 0.0
        %1204 = vmatpush.msra.mxu0 0.0
        %1205 = vmatpush.msra.mxu0 0.0
        %1206 = vmatpush.msra.mxu0 0.0
        %1207 = vmatpush.msra.mxu0 %v1187
        %1208 = vmatpush.msra.mxu0 %v1185
        %1209 = vmatpush.msra.mxu0 %v1183
        %1210 = vmatpush.msra.mxu0 %v1181
        %1211 = vmatmul.f32.gmra.mxu0 %v547
        %v1212 = vpop.f32.mrf.mxu0
        %v1213 = vadd.f32 %v1193, %v1212
        %1214 = vmatmul.f32.gmra.mxu0 %v550
        %v1215 = vpop.f32.mrf.mxu0
        %v1216 = vadd.f32 %v1193, %v1215
        %1217 = vdwg.mxu0
        %v1219 = vsel %vm606, %v1141, 0
        %v1222 = vsel %vm606, %v1175, 0
        %v1225 = vsel %vm606, %v1178, 0
        %1227 = vmatpush.xpose.msra.mxu0 0.0
        %1228 = vmatpush.xpose.msra.mxu0 0.0
        %1229 = vmatpush.xpose.msra.mxu0 0.0
        %1230 = vmatpush.xpose.msra.mxu0 0.0
        %1231 = vmatpush.xpose.msra.mxu0 0.0
        %1232 = vmatpush.xpose.msra.mxu0 0.0
        %1233 = vmatpush.xpose.msra.mxu0 0.0
        %1234 = vmatpush.xpose.msra.mxu0 0.0
        %1235 = vmatpush.xpose.msra.mxu0 0.0
        %1236 = vmatpush.xpose.msra.mxu0 0.0
        %1237 = vmatpush.xpose.msra.mxu0 0.0
        %1238 = vmatpush.xpose.msra.mxu0 0.0
        %1239 = vmatpush.xpose.msra.mxu0 0.0
        %1240 = vmatpush.xpose.msra.mxu0 0.0
        %1241 = vmatpush.xpose.msra.mxu0 %v1225
        %1242 = vmatpush.xpose.msra.mxu0 %v1222
        %1243 = vmatmul.f32.gmra.mxu0 %v1219
        %v1244 = vpop.f32.mrf.mxu0
        %v1245 = vadd.f32 0.0, %v1244
        %1246 = vdwg.mxu0
        %v1247 = vsel %vm636, %v1245, -inf
        %1248 = vmax.xlane.f32.xlu0 %v1247
        %v1249 = vpop.xlane.xlu0 %1248
        %v1250 = vsub.f32 %v1245, %v1249
        %v1251 = vmul.f32 %v1250, 1.442695
        %v1252 = vpow.pop %v1251
        %v1253 = vsel %vm636, %v1252, 0.0
        %1254 = vadd.xlane.f32.xlu0 %v1253
        %v1255 = vpop.xlane.xlu0 %1254
        %v1256 = vrcp.pop %v1255
        %v1257 = vmul.f32 %v1252, %v1256
        %v1259 = vsel %vm636, %v1257, 0
        %1261 = vmatpush.msra.mxu0 0.0
        %1262 = vmatpush.msra.mxu0 0.0
        %1263 = vmatpush.msra.mxu0 0.0
        %1264 = vmatpush.msra.mxu0 0.0
        %1265 = vmatpush.msra.mxu0 0.0
        %1266 = vmatpush.msra.mxu0 0.0
        %1267 = vmatpush.msra.mxu0 0.0
        %1268 = vmatpush.msra.mxu0 0.0
        %1269 = vmatpush.msra.mxu0 0.0
        %1270 = vmatpush.msra.mxu0 0.0
        %1271 = vmatpush.msra.mxu0 0.0
        %1272 = vmatpush.msra.mxu0 0.0
        %1273 = vmatpush.msra.mxu0 0.0
        %1274 = vmatpush.msra.mxu0 0.0
        %1275 = vmatpush.msra.mxu0 %v1216
        %1276 = vmatpush.msra.mxu0 %v1213
        %1277 = vmatmul.f32.gmra.mxu0 %v1259
        %v1278 = vpop.f32.mrf.mxu0
        %v1279 = vadd.f32 0.0, %v1278
        %1280 = vdwg.mxu0
        %v1281 = vld [vmem:[#allocation11 + $0x18] sm:$0xff]
        %v1283 = vsel %vm606, %v1279, 0
        %1285 = vmatpush.msra.mxu0 0.0
        %1286 = vmatpush.msra.mxu0 0.0
        %1287 = vmatpush.msra.mxu0 0.0
        %1288 = vmatpush.msra.mxu0 0.0
        %1289 = vmatpush.msra.mxu0 0.0
        %1290 = vmatpush.msra.mxu0 0.0
        %1291 = vmatpush.msra.mxu0 0.0
        %1292 = vmatpush.msra.mxu0 0.0
        %1293 = vmatpush.msra.mxu0 0.0
        %1294 = vmatpush.msra.mxu0 0.0
        %1295 = vmatpush.msra.mxu0 0.0
        %1296 = vmatpush.msra.mxu0 0.0
        %1297 = vmatpush.msra.mxu0 0.0
        %1298 = vmatpush.msra.mxu0 0.0
        %1299 = vmatpush.msra.mxu0 0.0
        %1300 = vmatpush.msra.mxu0 %v1281
        %1301 = vmatmul.f32.gmra.mxu0 %v1283
        %v1302 = vpop.f32.mrf.mxu0
        %v1303 = vadd.f32 0.0, %v1302
        %1304 = vdwg.mxu0
        %v1305 = vadd.f32 %v1105, %v1303
        %v1306 = vld [vmem:[%s9] sm:$0x1]
        %v1308 = vperm.slane %v1306, 0
        %v1310 = vadd.f32 %v1305, %v1308
        %1311 = vst.msk [vmem:[%s501] sm:$0xff] %vm513, %v1310
        %s1312 = sand.u32 %s276, 1
        %s1313 = scalar_lea.sflag [#allocation4], %s1312
        %s1314 = sand.u32 %s276, 1
        %s1315 = smul.addr %s1314, 8
        %s1316 = scalar_lea.vmem [#allocation13], %s1315
        // Predicated region
        $region85: #{tpu_custom_call.1} parent=59 // pred_check
          %p1317 = pneg %p286
        $region86: #{tpu_custom_call.1} parent=59 // pred_check_branch
          %1319 = sbr.rel (%p1317) target = $region88
        $region87: #{tpu_custom_call.1} parent=59 // pred_region
          %1321 = vsyncadd %s1313, 0
          %s1322 = sadd.s32 %s37, %s36
          %s1323 = smul.addr %s1322, 8
          %s1324 = scalar_lea.hbm %s10, %s1323
          %s1326 = sshll.u32 %s1316, 4
          %s1327 = int_to_ptr.vmem [resolvable:$true] %s1326
          %s1328 = sshll.u32 %s1324, 4
          %s1329 = int_to_ptr.hbm [resolvable:$true] %s1328
          %1331 = dma.vmem_to_hbm [thread:$0]  %s1327, 128, %s1329, %s1313
        $region88: #{tpu_custom_call.1} parent=59 // pred_fallthru
          _
      $region60: #{tpu_custom_call.1} parent=5 // pred_fallthru
        _
      %p1332 = scmp.le.s32.totalorder 2, %s27
      // Predicated region
      $region89: #{tpu_custom_call.1} parent=5 // pred_check
        %p1333 = pneg %p1332
      $region90: #{tpu_custom_call.1} parent=5 // pred_check_branch
        %1335 = sbr.rel (%p1333) target = $region92
      $region91: #{tpu_custom_call.1} parent=5 // pred_region
        %s1336 = ssub.s32 %s27, 2
        // Predicated region
        $region93: #{tpu_custom_call.1} parent=91 // pred_check
          %p1337 = pneg %p292
        $region94: #{tpu_custom_call.1} parent=91 // pred_check_branch
          %1339 = sbr.rel (%p1337) target = $region96
        $region95: #{tpu_custom_call.1} parent=91 // pred_region
          %s1340 = sand.u32 %s277, 1
          %s1341 = scalar_lea.sflag [#allocation4], %s1340
          %s1342 = sand.u32 %s277, 1
          %s1343 = smul.addr %s1342, 8
          %s1344 = scalar_lea.vmem [#allocation13], %s1343
          %1346 = dma.done %s1341, 128
        $region96: #{tpu_custom_call.1} parent=91 // pred_fallthru
          _
      $region92: #{tpu_custom_call.1} parent=5 // pred_fallthru
        _
    $region6: #{tpu_custom_call.1} parent=1 // loop_footer
      %s31 = sadd.s32 1, %s27
    $region7: #{tpu_custom_call.1} parent=1 // loop_footer_branch
      %26 = sbr.rel target = $region3
    $region8: #{tpu_custom_call.1} parent=1 // loop_exit
      _
    %1347 = vsyncpa [#allocation3], 1
    %s1348 = scalar_lea.sflag [#allocation3], 1
    %1349 = vsyncpa %s1348, 1
    %1350 = vsyncpa [#allocation6], 1
    %s1351 = scalar_lea.sflag [#allocation6], 1
    %1352 = vsyncpa %s1351, 1
    %1353 = vsyncpa [#allocation9], 1
    %1354 = vsyncpa [#allocation12], 1
    %1355 = vsyncpa [#allocation4], 1
    %s1356 = scalar_lea.sflag [#allocation4], 1
    %1357 = vsyncpa %s1356, 1

</llo_original>
